<compile_context>
chip_gen: v5e
topology: v5e:2x2
jax: 0.10.0
libtpu: 0.0.40
codegen_flags: <defaults>
</compile_context>

<pallas_src>
import functools

import numpy as np
import jax
import jax.numpy as jnp
from jax.experimental import pallas as pl
from jax.experimental.pallas import tpu as pltpu

_EPS = 1.1920928955078125e-07   # torch.finfo(torch.float32).eps
_PREEMPH = 0.97
_MS_FRAME_LENGTH = 25.0
_MS_FRAME_SHIFT = 10.0


def _mel_scale(hz):
    return 1127.0 * np.log(1.0 + np.asarray(hz, dtype=np.float64) / 700.0)


def _get_mel_banks(num_bins, padded_window_size, sample_freq,
                   low_freq=20.0, high_freq=0.0):
    """Mirrors torchaudio.compliance.kaldi.get_mel_banks (vtln_warp == 1.0)."""
    num_fft_bins = padded_window_size // 2
    nyquist = 0.5 * sample_freq
    if high_freq <= 0.0:
        high_freq += nyquist
    fft_bin_width = sample_freq / padded_window_size
    mel_low = _mel_scale(low_freq)
    mel_high = _mel_scale(high_freq)
    mel_freq_delta = (mel_high - mel_low) / (num_bins + 1)
    b = np.arange(num_bins, dtype=np.float64)[:, None]
    left_mel = mel_low + b * mel_freq_delta
    center_mel = mel_low + (b + 1.0) * mel_freq_delta
    right_mel = mel_low + (b + 2.0) * mel_freq_delta
    mel = _mel_scale(fft_bin_width * np.arange(num_fft_bins))[None, :]
    up_slope = (mel - left_mel) / (center_mel - left_mel)
    down_slope = (right_mel - mel) / (right_mel - center_mel)
    bins = np.maximum(0.0, np.minimum(up_slope, down_slope))
    return bins                              # (num_bins, num_fft_bins) float64


def _povey_window(window_size):
    n = np.arange(window_size, dtype=np.float64)
    return (0.5 - 0.5 * np.cos(2.0 * np.pi * n / (window_size - 1))) ** 0.85


def _round_up(x, m):
    return ((x + m - 1) // m) * m


def _build_frame_to_spectrum(window_size, window_shift, padded, nb):
    """Fold DC-removal, pre-emphasis, Povey window and the real DFT of the
    zero-padded frame into one linear map, chunked per shift-block.

    Returns M of shape (nb, window_shift, 2*num_freq) such that
        spectrum[i, :] = sum_k blocks[i + k, :] @ M[k]
    where blocks is the waveform reshaped to (rows, window_shift)."""
    w = window_size
    num_freq = padded // 2
    win = _povey_window(w)
    # Apply the (linear) frame processing to every basis vector e_i; row i of
    # the resulting matrix is the processed e_i, so frame_row @ T == processed frame.
    t = np.eye(w, dtype=np.float64)
    t = t - t.mean(axis=1, keepdims=True)                                   # remove_dc_offset
    t = t - _PREEMPH * np.concatenate([t[:, :1], t[:, :-1]], axis=1)        # pre-emphasis (replicate pad)
    t = t * win[None, :]                                                    # povey window
    p = np.arange(w, dtype=np.float64)[:, None]
    f = np.arange(num_freq, dtype=np.float64)[None, :]
    ang = 2.0 * np.pi * p * f / padded
    dft_w = np.concatenate([np.cos(ang), np.sin(ang)], axis=1)              # (W, 2F); zero-pad rows >= W drop out
    m = t @ dft_w                                                           # (W, 2F)
    m_ext = np.zeros((nb * window_shift, 2 * num_freq), np.float64)
    m_ext[:w] = m
    return m_ext.reshape(nb, window_shift, 2 * num_freq).astype(np.float32)


def _fbank_kernel(blk_a_ref, blk_b_ref, dft_ref, mel_ref, out_ref, *,
                  frame_tile, nb):
    # blk_a_ref: (TM, S)   blk_b_ref: (8, S)   waveform shift-blocks (dft_dtype)
    # dft_ref:   (nb, S, 2F)  folded frame->spectrum map
    # mel_ref:   (F, n_mels)  out_ref: (TM, n_mels) f32
    a = blk_a_ref[...]
    # Frame i needs block rows i..i+nb-1, so the tile overlaps into the next
    # few rows (blk_b). Build the nb shifted views with plain f32 slices.
    v = jnp.concatenate(
        [a.astype(jnp.float32), blk_b_ref[...].astype(jnp.float32)], axis=0)

    y = jnp.dot(a, dft_ref[0], preferred_element_type=jnp.float32)
    for k in range(1, nb):
        vk = v[k:k + frame_tile].astype(a.dtype)
        y = y + jnp.dot(vk, dft_ref[k], preferred_element_type=jnp.float32)

    num_freq = y.shape[-1] // 2
    re = y[:, :num_freq]
    im = y[:, num_freq:]
    power = re * re + im * im

    mel = jnp.dot(power.astype(mel_ref.dtype), mel_ref[...],
                  preferred_element_type=jnp.float32)
    out_ref[...] = jnp.log(jnp.maximum(mel, _EPS))


def filterbank_feature(waveform, sample_rate, n_mels=80,
                       max_frame_tile=512, dft_dtype=jnp.bfloat16):
    """Equivalent of FilterbankFeature.forward(input, sample_rate).

    waveform: (channels, num_samples) float32; kaldi's channel=-1 -> channel 0.
    Returns (num_frames, n_mels) float32.

    max_frame_tile: 512 default; 1024 also fits VMEM on v5e/v6e/v7x.
    dft_dtype=jnp.float32 for tighter numerical parity with torchaudio.
    """
    waveform = jnp.asarray(waveform, jnp.float32)
    x = waveform[0] if waveform.ndim == 2 else waveform.reshape(-1)
    num_samples = x.shape[0]

    window_size = int(sample_rate * _MS_FRAME_LENGTH * 0.001)
    window_shift = int(sample_rate * _MS_FRAME_SHIFT * 0.001)
    if num_samples < window_size:
        raise ValueError(
            f"waveform too short: {num_samples} samples < one {window_size}-sample frame")
    padded = int(pl.next_power_of_2(window_size))
    num_freq = padded // 2
    num_frames = 1 + (num_samples - window_size) // window_shift
    nb = -(-window_size // window_shift)          # shift-blocks per frame (3 for 25/10 ms)
    if nb > 8:
        raise NotImplementedError("window_size > 8 * window_shift not supported")

    # --- frame tiling: large tiles amortize the ~0.35us/step overhead; keep an
    # even grid-step count when >1 so v7x's two TensorCores stay balanced. ---
    min_grid = pl.cdiv(num_frames, max_frame_tile)
    if min_grid <= 1:
        grid_m = 2 if num_frames >= 16 else 1
    else:
        grid_m = _round_up(min_grid, 2)
    frame_tile = max(8, _round_up(pl.cdiv(num_frames, grid_m), 8))
    grid_m = pl.cdiv(num_frames, frame_tile)

    # --- waveform -> (rows, shift) blocks; frame i = block rows i..i+nb-1.
    # One pad+cast pass; no gather, no duplicated frames array. ---
    n_rows = grid_m * frame_tile + 8
    x_pad = jnp.pad(x, (0, n_rows * window_shift - num_samples))
    blocks = x_pad.astype(dft_dtype).reshape(n_rows, window_shift)

    dft = jnp.asarray(
        _build_frame_to_spectrum(window_size, window_shift, padded, nb), dft_dtype)
    mel_t = jnp.asarray(
        _get_mel_banks(n_mels, padded, float(sample_rate)).T, dft_dtype)   # (F, n_mels)

    # TODO(synk): kaldi dither is 0.0 by default; the RNG path is not replicated.
    kernel = functools.partial(_fbank_kernel, frame_tile=frame_tile, nb=nb)
    blocks_per_tile = frame_tile // 8
    out = pl.pallas_call(
        kernel,
        out_shape=jax.ShapeDtypeStruct((num_frames, n_mels), jnp.float32),
        grid_spec=pltpu.PrefetchScalarGridSpec(
            num_scalar_prefetch=0,
            grid=(grid_m,),
            in_specs=[
                # main tile of shift-blocks
                pl.BlockSpec((frame_tile, window_shift), lambda i: (i, 0)),
                # 8-row overlap tail (the same blocks array, next 8 rows)
                pl.BlockSpec((8, window_shift),
                             lambda i: ((i + 1) * blocks_per_tile, 0)),
                # grid-invariant folded DFT and mel matrices
                pl.BlockSpec((nb, window_shift, 2 * num_freq), lambda i: (0, 0, 0)),
                pl.BlockSpec((num_freq, n_mels), lambda i: (0, 0)),
            ],
            out_specs=pl.BlockSpec((frame_tile, n_mels), lambda i: (i, 0)),
        ),
        compiler_params=pltpu.CompilerParams(
            dimension_semantics=("parallel",)),
    )(blocks, blocks, dft, mel_t)
    return out            # exact (num_frames, n_mels); no post-kernel slice


def _reference_fbank(x, sample_rate, n_mels):
    """Pure NumPy float64 kaldi-fbank reference (dither=0) for self-checking."""
    x = np.asarray(x, np.float64)
    w = int(sample_rate * _MS_FRAME_LENGTH * 0.001)
    s = int(sample_rate * _MS_FRAME_SHIFT * 0.001)
    padded = int(pl.next_power_of_2(w))
    nf = 1 + (len(x) - w) // s
    idx = np.arange(nf)[:, None] * s + np.arange(w)[None, :]
    fr = x[idx]
    fr = fr - fr.mean(axis=1, keepdims=True)
    fr = fr - _PREEMPH * np.concatenate([fr[:, :1], fr[:, :-1]], axis=1)
    fr = fr * _povey_window(w)[None, :]
    spec = np.fft.rfft(fr, n=padded, axis=1)
    power = np.abs(spec) ** 2
    mel = power[:, :padded // 2] @ _get_mel_banks(n_mels, padded, float(sample_rate)).T
    return np.log(np.maximum(mel, _EPS))


if __name__ == "__main__":
    key = jax.random.PRNGKey(0)
    sample_rate = 16000
    n_mels = 80
    # mono waveform, 0.25 s @ 16 kHz -> 23 frames of 25 ms with 10 ms shift
    waveform = jax.random.normal(key, (1, 4000), dtype=jnp.float32)

    feat = filterbank_feature(waveform, sample_rate, n_mels=n_mels)
    feat = jax.block_until_ready(feat)

    expected_frames = 1 + (4000 - int(sample_rate * 0.025)) // int(sample_rate * 0.010)
    assert feat.shape == (expected_frames, n_mels), feat.shape
    assert feat.dtype == jnp.float32
    assert bool(jnp.all(jnp.isfinite(feat)))

    # full-precision kernel path vs. independent NumPy/float64 reference
    feat32 = jax.block_until_ready(
        filterbank_feature(waveform, sample_rate, n_mels=n_mels,
                           dft_dtype=jnp.float32))
    ref = _reference_fbank(np.asarray(waveform)[0], sample_rate, n_mels)
    np.testing.assert_allclose(np.asarray(feat32), ref, rtol=0.0, atol=1e-1)

    print("KERNEL_OK")
</pallas_src>

<mosaic_0001>
module attributes {stable_mosaic.version = 11 : i64} {
  func.func @_fbank_kernel(%arg0: i32, %arg1: memref<16x160xbf16, #tpu.memory_space<vmem>>, %arg2: memref<8x160xbf16, #tpu.memory_space<vmem>>, %arg3: memref<3x160x512xbf16, #tpu.memory_space<vmem>>, %arg4: memref<256x80xbf16, #tpu.memory_space<vmem>>, %arg5: memref<16x80xf32, #tpu.memory_space<vmem>>) attributes {dimension_semantics = [#tpu.dimension_semantics<parallel>], iteration_bounds = array<i64: 2>, scalar_prefetch = 0 : i64, scratch_operands = 0 : i64, tpu.core_type = #tpu.core_type<tc>, window_params = [{transform_indices = @transform_0, window_bounds = array<i64: 16, 160>}, {transform_indices = @transform_1, window_bounds = array<i64: 8, 160>}, {pipeline_mode = #tpu.pipeline_mode<synchronous>, transform_indices = @transform_2, window_bounds = array<i64: 3, 160, 512>}, {pipeline_mode = #tpu.pipeline_mode<synchronous>, transform_indices = @transform_3, window_bounds = array<i64: 256, 80>}, {transform_indices = @transform_4, window_bounds = array<i64: 16, 80>}]} {
    %c0 = arith.constant 0 : index
    %c0_0 = arith.constant 0 : index
    %0 = vector.load %arg1[%c0, %c0_0] : memref<16x160xbf16, #tpu.memory_space<vmem>>, vector<16x160xbf16>
    %1 = arith.extf %0 : vector<16x160xbf16> to vector<16x160xf32>
    %c0_1 = arith.constant 0 : index
    %c0_2 = arith.constant 0 : index
    %2 = vector.load %arg2[%c0_1, %c0_2] : memref<8x160xbf16, #tpu.memory_space<vmem>>, vector<8x160xbf16>
    %3 = arith.extf %2 : vector<8x160xbf16> to vector<8x160xf32>
    %4 = tpu.concatenate %1, %3 in 0 : vector<16x160xf32>, vector<8x160xf32> -> vector<24x160xf32>
    %c0_3 = arith.constant 0 : index
    %c0_4 = arith.constant 0 : index
    %c0_5 = arith.constant 0 : index
    %5 = vector.load %arg3[%c0_3, %c0_4, %c0_5] : memref<3x160x512xbf16, #tpu.memory_space<vmem>>, vector<1x160x512xbf16>
    %6 = vector.shape_cast %5 : vector<1x160x512xbf16> to vector<160x512xbf16>
    %cst = arith.constant dense<0.000000e+00> : vector<16x512xf32>
    %7 = tpu.matmul %0, %6, %cst {dimension_numbers = #tpu.dot_dimension_numbers<[1], [0], [0], [1], [0, 0, 1, 1], [], []>} : vector<16x160xbf16>, vector<160x512xbf16>, vector<16x512xf32> -> vector<16x512xf32>
    %8 = vector.extract_strided_slice %4 {offsets = [1, 0], sizes = [16, 160], strides = [1, 1]} : vector<24x160xf32> to vector<16x160xf32>
    %9 = arith.truncf %8 : vector<16x160xf32> to vector<16x160xbf16>
    %c1 = arith.constant 1 : index
    %c0_6 = arith.constant 0 : index
    %c0_7 = arith.constant 0 : index
    %10 = vector.load %arg3[%c1, %c0_6, %c0_7] : memref<3x160x512xbf16, #tpu.memory_space<vmem>>, vector<1x160x512xbf16>
    %11 = vector.shape_cast %10 : vector<1x160x512xbf16> to vector<160x512xbf16>
    %cst_8 = arith.constant dense<0.000000e+00> : vector<16x512xf32>
    %12 = tpu.matmul %9, %11, %cst_8 {dimension_numbers = #tpu.dot_dimension_numbers<[1], [0], [0], [1], [0, 0, 1, 1], [], []>} : vector<16x160xbf16>, vector<160x512xbf16>, vector<16x512xf32> -> vector<16x512xf32>
    %13 = arith.addf %7, %12 : vector<16x512xf32>
    %14 = vector.extract_strided_slice %4 {offsets = [2, 0], sizes = [16, 160], strides = [1, 1]} : vector<24x160xf32> to vector<16x160xf32>
    %15 = arith.truncf %14 : vector<16x160xf32> to vector<16x160xbf16>
    %c2 = arith.constant 2 : index
    %c0_9 = arith.constant 0 : index
    %c0_10 = arith.constant 0 : index
    %16 = vector.load %arg3[%c2, %c0_9, %c0_10] : memref<3x160x512xbf16, #tpu.memory_space<vmem>>, vector<1x160x512xbf16>
    %17 = vector.shape_cast %16 : vector<1x160x512xbf16> to vector<160x512xbf16>
    %cst_11 = arith.constant dense<0.000000e+00> : vector<16x512xf32>
    %18 = tpu.matmul %15, %17, %cst_11 {dimension_numbers = #tpu.dot_dimension_numbers<[1], [0], [0], [1], [0, 0, 1, 1], [], []>} : vector<16x160xbf16>, vector<160x512xbf16>, vector<16x512xf32> -> vector<16x512xf32>
    %19 = arith.addf %13, %18 : vector<16x512xf32>
    %20 = vector.extract_strided_slice %19 {offsets = [0, 0], sizes = [16, 256], strides = [1, 1]} : vector<16x512xf32> to vector<16x256xf32>
    %21 = vector.extract_strided_slice %19 {offsets = [0, 256], sizes = [16, 256], strides = [1, 1]} : vector<16x512xf32> to vector<16x256xf32>
    %22 = arith.mulf %20, %20 : vector<16x256xf32>
    %23 = arith.mulf %21, %21 : vector<16x256xf32>
    %24 = arith.addf %22, %23 : vector<16x256xf32>
    %25 = arith.truncf %24 : vector<16x256xf32> to vector<16x256xbf16>
    %c0_12 = arith.constant 0 : index
    %c0_13 = arith.constant 0 : index
    %26 = vector.load %arg4[%c0_12, %c0_13] : memref<256x80xbf16, #tpu.memory_space<vmem>>, vector<256x80xbf16>
    %cst_14 = arith.constant dense<0.000000e+00> : vector<16x80xf32>
    %27 = tpu.matmul %25, %26, %cst_14 {dimension_numbers = #tpu.dot_dimension_numbers<[1], [0], [0], [1], [0, 0, 1, 1], [], []>} : vector<16x256xbf16>, vector<256x80xbf16>, vector<16x80xf32> -> vector<16x80xf32>
    %cst_15 = arith.constant 1.1920929E-7 : f32
    %28 = vector.broadcast %cst_15 : f32 to vector<16x80xf32>
    %29 = arith.maximumf %27, %28 : vector<16x80xf32>
    %30 = math.log %29 : vector<16x80xf32>
    %c0_16 = arith.constant 0 : index
    %c0_17 = arith.constant 0 : index
    %31 = vector.load %arg5[%c0_16, %c0_17] : memref<16x80xf32, #tpu.memory_space<vmem>>, vector<16x80xf32>
    tpu.vector_store %arg5[%c0_16, %c0_17], %30 {strides = array<i32>} : memref<16x80xf32, #tpu.memory_space<vmem>>, vector<16x80xf32>,
    return
  }
  func.func @transform_0(%arg0: i32) -> (i32, i32) {
    %c0_i32 = arith.constant 0 : i32
    %c0_i32_0 = arith.constant 0 : i32
    return %arg0, %c0_i32 : i32, i32
  }
  func.func @transform_1(%arg0: i32) -> (i32, i32) {
    %c1_i32 = arith.constant 1 : i32
    %0 = arith.addi %arg0, %c1_i32 : i32
    %c2_i32 = arith.constant 2 : i32
    %1 = arith.muli %0, %c2_i32 : i32
    %c0_i32 = arith.constant 0 : i32
    %c0_i32_0 = arith.constant 0 : i32
    return %1, %c0_i32 : i32, i32
  }
  func.func @transform_2(%arg0: i32) -> (i32, i32, i32) {
    %c0_i32 = arith.constant 0 : i32
    %c0_i32_0 = arith.constant 0 : i32
    %c0_i32_1 = arith.constant 0 : i32
    %c0_i32_2 = arith.constant 0 : i32
    return %c0_i32, %c0_i32_0, %c0_i32_1 : i32, i32, i32
  }
  func.func @transform_3(%arg0: i32) -> (i32, i32) {
    %c0_i32 = arith.constant 0 : i32
    %c0_i32_0 = arith.constant 0 : i32
    %c0_i32_1 = arith.constant 0 : i32
    return %c0_i32, %c0_i32_0 : i32, i32
  }
  func.func @transform_4(%arg0: i32) -> (i32, i32) {
    %c0_i32 = arith.constant 0 : i32
    %c0_i32_0 = arith.constant 0 : i32
    return %arg0, %c0_i32 : i32, i32
  }
}

</mosaic_0001>

<llo_original>
// kernel: tpu_custom_call.1
$region0: #{tpu_custom_call.1}
  #allocation0 [shape = 'u32[]', space=smem, size = 0x4, offset = 0x4, fixed_abs, tag = 'smem constant byte address 0x4 - core index']
  #allocation1 [shape = 'u32[72,128]{1,0:T(1,128)}', space=vmem, size = 0x9000, scoped, tag = 'internal scratch']
  %s0 = inlined_call_operand.vmem [shape: bf16[40,160], index: 0, kind: input, shape index: {}]
  %s1 = inlined_call_operand.vmem [shape: bf16[40,160], index: 1, kind: input, shape index: {}]
  %s2 = inlined_call_operand.hbm [shape: bf16[3,160,512], index: 2, kind: input, shape index: {}]
  %s3 = inlined_call_operand.vmem [shape: bf16[256,80], index: 3, kind: input, shape index: {}]
  %s4 = inlined_call_operand.hbm [shape: f32[23,80], index: 4, kind: output, shape index: {}]
  %s5 = sld [smem:[#allocation0]]
  $region53: #{tpu_custom_call.1} parent=0
    _
  %s7 = ssub.s32 1, %s5
  %s8 = scalar_select 0, %s7, %s5
  $region1: #{tpu_custom_call.1} parent=0
    #allocation2 [shape = 'u8[491520]{0}', space=vmem, size = 0x78000, scoped, tag = 'input window, operand 2, single buffered']
    #allocation3 [shape = 's32[2]{0}', space=sflag, size = 0x8, scoped, tag = 'scoped memory for tpu_custom_call.1']
    #allocation4 [shape = 's32[2]{0}', space=sflag, size = 0x8, scoped, tag = 'scoped memory for tpu_custom_call.1']
    #allocation5 [shape = 'u8[16384]{0}', space=vmem, size = 0x4000, scoped, tag = 'output window, operand 0']
    %9 = vsyncpa [#allocation3], 0
    %10 = vsyncpa [#allocation4], 0
    %s11 = scalar_lea.sflag [#allocation4], 1
    %12 = vsyncpa %s11, 0
    loop: start=0, step=1, limit=4
    $region2: #{tpu_custom_call.1} parent=1 // loop_pre_header
      _
    $region3: #{tpu_custom_call.1} parent=1 // loop_header
      %s14 = sphi 0, %s18
      %p15 = scmp.ge.s32.totalorder %s14, 4
      %s24 = sphi 0, %s26
      %s27 = sphi 0, %s24
      %s28 = sphi 0, %s27
      %s44 = sphi 0, %s28
      %s54 = sphi 0, %s56
      %s57 = sphi 0, %s54
      %s58 = sphi 0, %s57
      %s74 = sphi 0, %s58
      %s78 = sphi 0, %s78
      %s80 = sphi 0, %s78
      %s81 = sphi 0, %s80
      %s95 = sphi 0, %s81
      %s99 = sphi 0, %s99
      %s101 = sphi 0, %s99
      %s102 = sphi 0, %s101
      %s116 = sphi 0, %s102
      %s122 = sphi 0, %s124
      %s125 = sphi 0, %s122
      %s126 = sphi 0, %s125
      %s142 = sphi 0, %s126
    $region4: #{tpu_custom_call.1} parent=1 // loop_header_branch
      %17 = sbr.rel (%p15) target = $region8
    $region5: #{tpu_custom_call.1} parent=1 // loop_body
      %s19 = ssub.s32 %s14, 1
      %s20 = ssub.s32 %s14, 2
      %s21 = sadd.s32 %s14, 1
      %s22 = ssub.s32 %s14, %s21
      %p23 = scmp.eq.s32.totalorder %s22, 0
      %s25 = sadd.s32 %s24, 1
      %s26 = scalar_select %p23, %s24, %s25
      %p29 = pneg %p23
      %p30 = scmp.eq.s32.totalorder %s14, 1
      %p31 = por %p29, %p30
      %p32 = scmp.ne.s32.totalorder %s24, %s27
      %p33 = scmp.eq.s32.totalorder %s14, 0
      %p34 = por %p32, %p33
      %p35 = scmp.ne.s32.totalorder %s24, %s27
      %p36 = scmp.eq.s32.totalorder %s19, 1
      %p37 = por %p35, %p36
      %p38 = scmp.ne.s32.totalorder %s27, %s28
      %p39 = scmp.eq.s32.totalorder %s19, 0
      %p40 = por %p38, %p39
      %p41 = scmp.ne.s32.totalorder %s27, %s28
      %p42 = scmp.eq.s32.totalorder %s20, 1
      %p43 = por %p41, %p42
      %p45 = scmp.ne.s32.totalorder %s28, %s44
      %p46 = scmp.eq.s32.totalorder %s20, 0
      %p47 = por %p45, %p46
      %s48 = sadd.s32 %s14, 1
      %s49 = smul.u32 %s48, 2
      %s50 = sadd.s32 %s21, 1
      %s51 = smul.u32 %s50, 2
      %s52 = ssub.s32 %s49, %s51
      %p53 = scmp.eq.s32.totalorder %s52, 0
      %s55 = sadd.s32 %s54, 1
      %s56 = scalar_select %p53, %s54, %s55
      %p59 = pneg %p53
      %p60 = scmp.eq.s32.totalorder %s14, 1
      %p61 = por %p59, %p60
      %p62 = scmp.ne.s32.totalorder %s54, %s57
      %p63 = scmp.eq.s32.totalorder %s14, 0
      %p64 = por %p62, %p63
      %p65 = scmp.ne.s32.totalorder %s54, %s57
      %p66 = scmp.eq.s32.totalorder %s19, 1
      %p67 = por %p65, %p66
      %p68 = scmp.ne.s32.totalorder %s57, %s58
      %p69 = scmp.eq.s32.totalorder %s19, 0
      %p70 = por %p68, %p69
      %p71 = scmp.ne.s32.totalorder %s57, %s58
      %p72 = scmp.eq.s32.totalorder %s20, 1
      %p73 = por %p71, %p72
      %p75 = scmp.ne.s32.totalorder %s58, %s74
      %p76 = scmp.eq.s32.totalorder %s20, 0
      %p77 = por %p75, %p76
      %s79 = sadd.s32 %s78, 1
      %p82 = scmp.eq.s32.totalorder %s14, 1
      %p83 = scmp.ne.s32.totalorder %s78, %s80
      %p84 = scmp.eq.s32.totalorder %s14, 0
      %p85 = por %p83, %p84
      %p86 = scmp.ne.s32.totalorder %s78, %s80
      %p87 = scmp.eq.s32.totalorder %s19, 1
      %p88 = por %p86, %p87
      %p89 = scmp.ne.s32.totalorder %s80, %s81
      %p90 = scmp.eq.s32.totalorder %s19, 0
      %p91 = por %p89, %p90
      %p92 = scmp.ne.s32.totalorder %s80, %s81
      %p93 = scmp.eq.s32.totalorder %s20, 1
      %p94 = por %p92, %p93
      %p96 = scmp.ne.s32.totalorder %s81, %s95
      %p97 = scmp.eq.s32.totalorder %s20, 0
      %p98 = por %p96, %p97
      %s100 = sadd.s32 %s99, 1
      %p103 = scmp.eq.s32.totalorder %s14, 1
      %p104 = scmp.ne.s32.totalorder %s99, %s101
      %p105 = scmp.eq.s32.totalorder %s14, 0
      %p106 = por %p104, %p105
      %p107 = scmp.ne.s32.totalorder %s99, %s101
      %p108 = scmp.eq.s32.totalorder %s19, 1
      %p109 = por %p107, %p108
      %p110 = scmp.ne.s32.totalorder %s101, %s102
      %p111 = scmp.eq.s32.totalorder %s19, 0
      %p112 = por %p110, %p111
      %p113 = scmp.ne.s32.totalorder %s101, %s102
      %p114 = scmp.eq.s32.totalorder %s20, 1
      %p115 = por %p113, %p114
      %p117 = scmp.ne.s32.totalorder %s102, %s116
      %p118 = scmp.eq.s32.totalorder %s20, 0
      %p119 = por %p117, %p118
      %s120 = ssub.s32 %s14, %s21
      %p121 = scmp.eq.s32.totalorder %s120, 0
      %s123 = sadd.s32 %s122, 1
      %s124 = scalar_select %p121, %s122, %s123
      %p127 = pneg %p121
      %p128 = scmp.eq.s32.totalorder %s14, 1
      %p129 = por %p127, %p128
      %p130 = scmp.ne.s32.totalorder %s122, %s125
      %p131 = scmp.eq.s32.totalorder %s14, 0
      %p132 = por %p130, %p131
      %p133 = scmp.ne.s32.totalorder %s122, %s125
      %p134 = scmp.eq.s32.totalorder %s19, 1
      %p135 = por %p133, %p134
      %p136 = scmp.ne.s32.totalorder %s125, %s126
      %p137 = scmp.eq.s32.totalorder %s19, 0
      %p138 = por %p136, %p137
      %p139 = scmp.ne.s32.totalorder %s125, %s126
      %p140 = scmp.eq.s32.totalorder %s20, 1
      %p141 = por %p139, %p140
      %p143 = scmp.ne.s32.totalorder %s126, %s142
      %p144 = scmp.eq.s32.totalorder %s20, 0
      %p145 = por %p143, %p144
      %p146 = scmp.le.s32.totalorder 1, %s14
      %p147 = scmp.lt.s32.totalorder %s14, 3
      %p148 = pnand %p146, %p147
      %p149 = pneg %p148
      // Predicated region
      $region9: #{tpu_custom_call.1} parent=5 // pred_check
        _
      $region10: #{tpu_custom_call.1} parent=5 // pred_check_branch
        %151 = sbr.rel (%p148) target = $region12
      $region11: #{tpu_custom_call.1} parent=5 // pred_region
        %s152 = ssub.s32 %s14, 1
        // Predicated region
        $region13: #{tpu_custom_call.1} parent=11 // pred_check
          %p153 = pneg %p91
        $region14: #{tpu_custom_call.1} parent=11 // pred_check_branch
          %155 = sbr.rel (%p153) target = $region16
        $region15: #{tpu_custom_call.1} parent=11 // pred_region
          %157 = vsyncadd [#allocation3], 0
          %s158 = sshll.u32 %s2, 4
          %s159 = int_to_ptr.hbm [resolvable:$true] %s158
          %s160 = sshll.u32 [#allocation2], 4
          %s161 = int_to_ptr.vmem [resolvable:$true] %s160
          %166 = dma.hbm_to_vmem [thread:$0]  %s159, 15360, %s161, [#allocation3], 256, 256, 16
        $region16: #{tpu_custom_call.1} parent=11 // pred_fallthru
          _
        // Predicated region
        $region17: #{tpu_custom_call.1} parent=11 // pred_check
          %p167 = pneg %p112
        $region18: #{tpu_custom_call.1} parent=11 // pred_check_branch
          %169 = sbr.rel (%p167) target = $region20
        $region19: #{tpu_custom_call.1} parent=11 // pred_region
          _
        $region20: #{tpu_custom_call.1} parent=11 // pred_fallthru
          _
      $region12: #{tpu_custom_call.1} parent=5 // pred_fallthru
        _
      %p170 = scmp.lt.s32.totalorder %s14, 2
      // Predicated region
      $region21: #{tpu_custom_call.1} parent=5 // pred_check
        %p171 = pneg %p170
      $region22: #{tpu_custom_call.1} parent=5 // pred_check_branch
        %173 = sbr.rel (%p171) target = $region24
      $region23: #{tpu_custom_call.1} parent=5 // pred_region
        // Predicated region
        $region25: #{tpu_custom_call.1} parent=23 // pred_check
          %p174 = pneg %p34
        $region26: #{tpu_custom_call.1} parent=23 // pred_check_branch
          %176 = sbr.rel (%p174) target = $region28
        $region27: #{tpu_custom_call.1} parent=23 // pred_region
          %s177 = smul.u32 2, %s14
          %s178 = ssub.s32 5, %s177
          %p179 = scmp.lt.s32.totalorder %s178, 2
          %s180 = scalar_select %p179, %s178, 2
          %s181 = smul.u32 4, %s180
          %s182 = smul.u32 %s181, 2
          %p183 = scmp.lt.s32.totalorder %s177, 4
          %s184 = scalar_select %p183, %s177, 4
          %s185 = smul.addr %s184, 2
          %s186 = smul.addr %s185, 4
          %s187 = scalar_lea.vmem %s0, %s186
          %s188 = smul.u32 2, %s14
          %s189 = ssub.s32 5, %s188
          %p190 = scmp.lt.s32.totalorder %s189, 2
          %s191 = scalar_select %p190, %s189, 2
          %s192 = smul.u32 4, %s191
          %s193 = smul.u32 %s192, 2
        $region28: #{tpu_custom_call.1} parent=23 // pred_fallthru
          _
        // Predicated region
        $region29: #{tpu_custom_call.1} parent=23 // pred_check
          %p194 = pneg %p64
        $region30: #{tpu_custom_call.1} parent=23 // pred_check_branch
          %196 = sbr.rel (%p194) target = $region32
        $region31: #{tpu_custom_call.1} parent=23 // pred_region
          %s197 = sadd.s32 %s14, 1
          %s198 = smul.u32 %s197, 2
          %p199 = scmp.lt.s32.totalorder %s198, 4
          %s200 = scalar_select %p199, %s198, 4
          %s201 = smul.addr %s200, 2
          %s202 = smul.addr %s201, 4
          %s203 = scalar_lea.vmem %s1, %s202
          %s204 = sadd.s32 %s14, 1
          %s205 = smul.u32 %s204, 2
        $region32: #{tpu_custom_call.1} parent=23 // pred_fallthru
          _
      $region24: #{tpu_custom_call.1} parent=5 // pred_fallthru
        _
      %p206 = scmp.le.s32.totalorder 1, %s14
      %p207 = scmp.lt.s32.totalorder %s14, 3
      %p208 = pnand %p206, %p207
      %p209 = pneg %p208
      // Predicated region
      $region33: #{tpu_custom_call.1} parent=5 // pred_check
        _
      $region34: #{tpu_custom_call.1} parent=5 // pred_check_branch
        %211 = sbr.rel (%p208) target = $region36
      $region35: #{tpu_custom_call.1} parent=5 // pred_region
        %s212 = ssub.s32 %s14, 1
        // Predicated region
        $region37: #{tpu_custom_call.1} parent=35 // pred_check
          %p213 = pneg %p91
        $region38: #{tpu_custom_call.1} parent=35 // pred_check_branch
          %215 = sbr.rel (%p213) target = $region40
        $region39: #{tpu_custom_call.1} parent=35 // pred_region
          %217 = dma.done [#allocation3], 15360
        $region40: #{tpu_custom_call.1} parent=35 // pred_fallthru
          _
        %s218 = smul.u32 2, %s19
        %s219 = ssub.s32 5, %s218
        %p220 = scmp.lt.s32.totalorder %s219, 2
        %s221 = scalar_select %p220, %s219, 2
        %s222 = smul.u32 4, %s221
        %s223 = smul.u32 %s222, 2
        %p224 = scmp.lt.s32.totalorder %s218, 4
        %s225 = scalar_select %p224, %s218, 4
        %s226 = smul.addr %s225, 2
        %s227 = smul.addr %s226, 4
        %s228 = scalar_lea.vmem %s0, %s227
        %p229 = pneg %p40
        %p230 = pneg %p37
        %s231 = sadd.s32 %s19, 1
        %s232 = smul.u32 %s231, 2
        %p233 = scmp.lt.s32.totalorder %s232, 4
        %s234 = scalar_select %p233, %s232, 4
        %s235 = smul.addr %s234, 2
        %s236 = smul.addr %s235, 4
        %s237 = scalar_lea.vmem %s1, %s236
        %p238 = pneg %p70
        %p239 = pneg %p67
        %p240 = pneg %p91
        %p241 = pneg %p88
        %p242 = pneg %p112
        %p243 = pneg %p109
        %p244 = pneg %p138
        %p245 = pneg %p135
        %s246 = sand.u32 %s125, 1
        %s247 = scalar_lea.sflag [#allocation4], %s246
        %s248 = sand.u32 %s125, 1
        %s249 = smul.addr %s248, 16
        %s250 = scalar_lea.vmem [#allocation5], %s249
        %s251 = smul.u32 2, %s19
        %s252 = ssub.s32 5, %s251
        %p253 = scmp.lt.s32.totalorder %s252, 2
        %s254 = scalar_select %p253, %s252, 2
        %s255 = smul.u32 4, %s254
        %s256 = smul.u32 %s255, 2
        %p257 = scmp.lt.s32.totalorder %s251, 4
        %s258 = scalar_select %p257, %s251, 4
        %s259 = smul.addr %s258, 2
        %s260 = smul.addr %s259, 4
        %s261 = scalar_lea.vmem %s0, %s260
        %s262 = smul.u32 2, %s19
        %s263 = ssub.s32 5, %s262
        %p264 = scmp.lt.s32.totalorder %s263, 2
        %s265 = scalar_select %p264, %s263, 2
        %s266 = smul.u32 4, %s265
        %s267 = smul.u32 %s266, 2
        %s268 = sadd.s32 %s19, 1
        %s269 = smul.u32 %s268, 2
        %p270 = scmp.lt.s32.totalorder %s269, 4
        %s271 = scalar_select %p270, %s269, 4
        %s272 = smul.addr %s271, 2
        %s273 = smul.addr %s272, 4
        %s274 = scalar_lea.vmem %s1, %s273
        %s275 = sadd.s32 %s19, 1
        %s276 = smul.u32 %s275, 2
        %s277 = smul.u32 2, %s19
        %s278 = ssub.s32 3, %s277
        %p279 = scmp.lt.s32.totalorder %s278, 2
        %s280 = scalar_select %p279, %s278, 2
        %s281 = smul.u32 8, %s280
        %v283 = vld [vmem:[%s261] sm:$0xff]
        %v284 = vld [vmem:[%s261 + $0x8] sm:$0xff]
        %v285 = vunpack.c.l.bf16 %v283
        %v286 = vunpack.c.h.bf16 %v283
        %v287 = vunpack.c.l.bf16 %v284
        %v288 = vunpack.c.h.bf16 %v284
        %v289 = vld [vmem:[%s274] sm:$0xff]
        %v290 = vunpack.c.l.bf16 %v289
        %v291 = vunpack.c.h.bf16 %v289
        %v292 = vld [vmem:[#allocation2] sm:$0xff]
        %v293 = vld [vmem:[#allocation2 + $0x8] sm:$0xff]
        %v294 = vld [vmem:[#allocation2 + $0x10] sm:$0xff]
        %v295 = vld [vmem:[#allocation2 + $0x18] sm:$0xff]
        %v296 = vld [vmem:[#allocation2 + $0x20] sm:$0xff]
        %v297 = vld [vmem:[#allocation2 + $0x28] sm:$0xff]
        %v298 = vld [vmem:[#allocation2 + $0x30] sm:$0xff]
        %v299 = vld [vmem:[#allocation2 + $0x38] sm:$0xff]
        %v300 = vld [vmem:[#allocation2 + $0x40] sm:$0xff]
        %v301 = vld [vmem:[#allocation2 + $0x48] sm:$0xff]
        %v302 = vld [vmem:[#allocation2 + $0x50] sm:$0xff]
        %v303 = vld [vmem:[#allocation2 + $0x58] sm:$0xff]
        %v304 = vld [vmem:[#allocation2 + $0x60] sm:$0xff]
        %v305 = vld [vmem:[#allocation2 + $0x68] sm:$0xff]
        %v306 = vld [vmem:[#allocation2 + $0x70] sm:$0xff]
        %v307 = vld [vmem:[#allocation2 + $0x78] sm:$0xff]
        %v308 = vld [vmem:[#allocation2 + $0x80] sm:$0xff]
        %v309 = vld [vmem:[#allocation2 + $0x88] sm:$0xff]
        %v310 = vld [vmem:[#allocation2 + $0x90] sm:$0xff]
        %v311 = vld [vmem:[#allocation2 + $0x98] sm:$0xff]
        %v312 = vld [vmem:[#allocation2 + $0xa0] sm:$0xff]
        %v313 = vld [vmem:[#allocation2 + $0xa8] sm:$0xff]
        %v314 = vld [vmem:[#allocation2 + $0xb0] sm:$0xff]
        %v315 = vld [vmem:[#allocation2 + $0xb8] sm:$0xff]
        %v316 = vld [vmem:[#allocation2 + $0xc0] sm:$0xff]
        %v317 = vld [vmem:[#allocation2 + $0xc8] sm:$0xff]
        %v318 = vld [vmem:[#allocation2 + $0xd0] sm:$0xff]
        %v319 = vld [vmem:[#allocation2 + $0xd8] sm:$0xff]
        %v320 = vld [vmem:[#allocation2 + $0xe0] sm:$0xff]
        %v321 = vld [vmem:[#allocation2 + $0xe8] sm:$0xff]
        %v322 = vld [vmem:[#allocation2 + $0xf0] sm:$0xff]
        %v323 = vld [vmem:[#allocation2 + $0xf8] sm:$0xff]
        %v324 = vld [vmem:[#allocation2 + $0x100] sm:$0xff]
        %v325 = vld [vmem:[#allocation2 + $0x108] sm:$0xff]
        %v326 = vld [vmem:[#allocation2 + $0x110] sm:$0xff]
        %v327 = vld [vmem:[#allocation2 + $0x118] sm:$0xff]
        %v328 = vld [vmem:[#allocation2 + $0x120] sm:$0xff]
        %v329 = vld [vmem:[#allocation2 + $0x128] sm:$0xff]
        %v330 = vld [vmem:[#allocation2 + $0x130] sm:$0xff]
        %v331 = vld [vmem:[#allocation2 + $0x138] sm:$0xff]
        %v332 = vpack.c.bf16 %v287, %v285
        %v333 = vpack.c.bf16 %v288, %v286
        %v334 = vpack.c.bf16 %v290, %v290
        %v335 = vpack.c.bf16 %v291, %v291
        %s336 = scalar_lea.vmem [#allocation2], 320
        %v337 = vld [vmem:[%s336] sm:$0xff]
        %v338 = vld [vmem:[%s336 + $0x8] sm:$0xff]
        %v339 = vld [vmem:[%s336 + $0x10] sm:$0xff]
        %v340 = vld [vmem:[%s336 + $0x18] sm:$0xff]
        %v341 = vld [vmem:[%s336 + $0x20] sm:$0xff]
        %v342 = vld [vmem:[%s336 + $0x28] sm:$0xff]
        %v343 = vld [vmem:[%s336 + $0x30] sm:$0xff]
        %v344 = vld [vmem:[%s336 + $0x38] sm:$0xff]
        %v345 = vld [vmem:[%s336 + $0x40] sm:$0xff]
        %v346 = vld [vmem:[%s336 + $0x48] sm:$0xff]
        %v347 = vld [vmem:[%s336 + $0x50] sm:$0xff]
        %v348 = vld [vmem:[%s336 + $0x58] sm:$0xff]
        %v349 = vld [vmem:[%s336 + $0x60] sm:$0xff]
        %v350 = vld [vmem:[%s336 + $0x68] sm:$0xff]
        %v351 = vld [vmem:[%s336 + $0x70] sm:$0xff]
        %v352 = vld [vmem:[%s336 + $0x78] sm:$0xff]
        %v353 = vld [vmem:[%s336 + $0x80] sm:$0xff]
        %v354 = vld [vmem:[%s336 + $0x88] sm:$0xff]
        %v355 = vld [vmem:[%s336 + $0x90] sm:$0xff]
        %v356 = vld [vmem:[%s336 + $0x98] sm:$0xff]
        %v357 = vld [vmem:[%s336 + $0xa0] sm:$0xff]
        %v358 = vld [vmem:[%s336 + $0xa8] sm:$0xff]
        %v359 = vld [vmem:[%s336 + $0xb0] sm:$0xff]
        %v360 = vld [vmem:[%s336 + $0xb8] sm:$0xff]
        %v361 = vld [vmem:[%s336 + $0xc0] sm:$0xff]
        %v362 = vld [vmem:[%s336 + $0xc8] sm:$0xff]
        %v363 = vld [vmem:[%s336 + $0xd0] sm:$0xff]
        %v364 = vld [vmem:[%s336 + $0xd8] sm:$0xff]
        %v365 = vld [vmem:[%s336 + $0xe0] sm:$0xff]
        %v366 = vld [vmem:[%s336 + $0xe8] sm:$0xff]
        %v367 = vld [vmem:[%s336 + $0xf0] sm:$0xff]
        %v368 = vld [vmem:[%s336 + $0xf8] sm:$0xff]
        %v369 = vld [vmem:[%s336 + $0x100] sm:$0xff]
        %v370 = vld [vmem:[%s336 + $0x108] sm:$0xff]
        %v371 = vld [vmem:[%s336 + $0x110] sm:$0xff]
        %v372 = vld [vmem:[%s336 + $0x118] sm:$0xff]
        %v373 = vld [vmem:[%s336 + $0x120] sm:$0xff]
        %v374 = vld [vmem:[%s336 + $0x128] sm:$0xff]
        %v375 = vld [vmem:[%s336 + $0x130] sm:$0xff]
        %v376 = vld [vmem:[%s336 + $0x138] sm:$0xff]
        %vm377 = vsmask.f32 7424
        %v379 = vshrl.u32 %v332, 16
        %v381 = vshll.u32 %v332, 16
        %v383 = vrot.slane %v381, 1
        %v384 = vor.u32 %v379, %v383
        %v386 = vshll.u32 %v334, 16
        %v388 = vrot.slane %v386, 1
        %v389 = vsel %vm377, %v384, %v388
        %v391 = vshrl.u32 %v333, 16
        %v393 = vshll.u32 %v333, 16
        %v395 = vrot.slane %v393, 1
        %v396 = vor.u32 %v391, %v395
        %v398 = vshll.u32 %v335, 16
        %v400 = vrot.slane %v398, 1
        %v401 = vsel %vm377, %v396, %v400
        %v443 = vunpack.c.l.b16 %v337
        %v444 = vunpack.c.h.b16 %v337
        %v445 = vunpack.c.l.b16 %v338
        %v446 = vunpack.c.h.b16 %v338
        %v447 = vunpack.c.l.b16 %v339
        %v448 = vunpack.c.h.b16 %v339
        %v449 = vunpack.c.l.b16 %v340
        %v450 = vunpack.c.h.b16 %v340
        %v451 = vunpack.c.l.b16 %v341
        %v452 = vunpack.c.h.b16 %v341
        %v453 = vunpack.c.l.b16 %v342
        %v454 = vunpack.c.h.b16 %v342
        %v455 = vunpack.c.l.b16 %v343
        %v456 = vunpack.c.h.b16 %v343
        %v457 = vunpack.c.l.b16 %v344
        %v458 = vunpack.c.h.b16 %v344
        %v459 = vunpack.c.l.b16 %v345
        %v460 = vunpack.c.h.b16 %v345
        %v461 = vunpack.c.l.b16 %v346
        %v462 = vunpack.c.h.b16 %v346
        %v463 = vunpack.c.l.b16 %v347
        %v464 = vunpack.c.h.b16 %v347
        %v465 = vunpack.c.l.b16 %v348
        %v466 = vunpack.c.h.b16 %v348
        %v467 = vunpack.c.l.b16 %v349
        %v468 = vunpack.c.h.b16 %v349
        %v469 = vunpack.c.l.b16 %v350
        %v470 = vunpack.c.h.b16 %v350
        %v471 = vunpack.c.l.b16 %v351
        %v472 = vunpack.c.h.b16 %v351
        %v473 = vunpack.c.l.b16 %v352
        %v474 = vunpack.c.h.b16 %v352
        %v475 = vunpack.c.l.b16 %v353
        %v476 = vunpack.c.h.b16 %v353
        %v477 = vunpack.c.l.b16 %v354
        %v478 = vunpack.c.h.b16 %v354
        %v479 = vunpack.c.l.b16 %v355
        %v480 = vunpack.c.h.b16 %v355
        %v481 = vunpack.c.l.b16 %v356
        %v482 = vunpack.c.h.b16 %v356
        %v483 = vunpack.c.l.b16 %v357
        %v484 = vunpack.c.h.b16 %v357
        %v485 = vunpack.c.l.b16 %v358
        %v486 = vunpack.c.h.b16 %v358
        %v487 = vunpack.c.l.b16 %v359
        %v488 = vunpack.c.h.b16 %v359
        %v489 = vunpack.c.l.b16 %v360
        %v490 = vunpack.c.h.b16 %v360
        %v491 = vunpack.c.l.b16 %v361
        %v492 = vunpack.c.h.b16 %v361
        %v493 = vunpack.c.l.b16 %v362
        %v494 = vunpack.c.h.b16 %v362
        %v495 = vunpack.c.l.b16 %v363
        %v496 = vunpack.c.h.b16 %v363
        %v497 = vunpack.c.l.b16 %v364
        %v498 = vunpack.c.h.b16 %v364
        %v499 = vunpack.c.l.b16 %v365
        %v500 = vunpack.c.h.b16 %v365
        %v501 = vunpack.c.l.b16 %v366
        %v502 = vunpack.c.h.b16 %v366
        %v503 = vunpack.c.l.b16 %v367
        %v504 = vunpack.c.h.b16 %v367
        %v505 = vunpack.c.l.b16 %v368
        %v506 = vunpack.c.h.b16 %v368
        %v507 = vunpack.c.l.b16 %v369
        %v508 = vunpack.c.h.b16 %v369
        %v509 = vunpack.c.l.b16 %v370
        %v510 = vunpack.c.h.b16 %v370
        %v511 = vunpack.c.l.b16 %v371
        %v512 = vunpack.c.h.b16 %v371
        %v513 = vunpack.c.l.b16 %v372
        %v514 = vunpack.c.h.b16 %v372
        %v515 = vunpack.c.l.b16 %v373
        %v516 = vunpack.c.h.b16 %v373
        %v517 = vunpack.c.l.b16 %v374
        %v518 = vunpack.c.h.b16 %v374
        %v519 = vunpack.c.l.b16 %v375
        %v520 = vunpack.c.h.b16 %v375
        %v521 = vunpack.c.l.b16 %v376
        %v522 = vunpack.c.h.b16 %v376
        %v523 = vpack.c.b16 %v447, %v443
        %v524 = vpack.c.b16 %v448, %v444
        %v525 = vpack.c.b16 %v449, %v445
        %v526 = vpack.c.b16 %v450, %v446
        %v527 = vpack.c.b16 %v455, %v451
        %v528 = vpack.c.b16 %v456, %v452
        %v529 = vpack.c.b16 %v457, %v453
        %v530 = vpack.c.b16 %v458, %v454
        %v531 = vpack.c.b16 %v463, %v459
        %v532 = vpack.c.b16 %v464, %v460
        %v533 = vpack.c.b16 %v465, %v461
        %v534 = vpack.c.b16 %v466, %v462
        %v535 = vpack.c.b16 %v471, %v467
        %v536 = vpack.c.b16 %v472, %v468
        %v537 = vpack.c.b16 %v473, %v469
        %v538 = vpack.c.b16 %v474, %v470
        %v539 = vpack.c.b16 %v479, %v475
        %v540 = vpack.c.b16 %v480, %v476
        %v541 = vpack.c.b16 %v481, %v477
        %v542 = vpack.c.b16 %v482, %v478
        %v543 = vpack.c.b16 %v487, %v483
        %v544 = vpack.c.b16 %v488, %v484
        %v545 = vpack.c.b16 %v489, %v485
        %v546 = vpack.c.b16 %v490, %v486
        %v547 = vpack.c.b16 %v495, %v491
        %v548 = vpack.c.b16 %v496, %v492
        %v549 = vpack.c.b16 %v497, %v493
        %v550 = vpack.c.b16 %v498, %v494
        %v551 = vpack.c.b16 %v503, %v499
        %v552 = vpack.c.b16 %v504, %v500
        %v553 = vpack.c.b16 %v505, %v501
        %v554 = vpack.c.b16 %v506, %v502
        %v555 = vpack.c.b16 %v511, %v507
        %v556 = vpack.c.b16 %v512, %v508
        %v557 = vpack.c.b16 %v513, %v509
        %v558 = vpack.c.b16 %v514, %v510
        %v559 = vpack.c.b16 %v519, %v515
        %v560 = vpack.c.b16 %v520, %v516
        %v561 = vpack.c.b16 %v521, %v517
        %v562 = vpack.c.b16 %v522, %v518
        %vm603 = vcmask 261120
        %v605 = vsel %vm603, %v401, 0
        %607 = vmatpush.bf16.msra.mxu0 %v551
        %608 = vmatpush.bf16.msra.mxu0 %v547
        %609 = vmatpush.bf16.msra.mxu0 %v543
        %610 = vmatpush.bf16.msra.mxu0 %v539
        %611 = vmatpush.bf16.msra.mxu0 %v535
        %612 = vmatpush.bf16.msra.mxu0 %v531
        %613 = vmatpush.bf16.msra.mxu0 %v527
        %614 = vmatpush.bf16.msra.mxu0 %v523
        %615 = vmatmul.bf16.gmra.mxu0 %v389
        %v616 = vpop.f32.mrf.mxu0
        %v617 = vadd.f32 0.0, %v616
        %v618 = vpop.f32.mrf.mxu0
        %v619 = vadd.f32 0.0, %v618
        %620 = vdwg.mxu0
        %621 = vmatpush.bf16.msra.mxu0 0
        %622 = vmatpush.bf16.msra.mxu0 0
        %623 = vmatpush.bf16.msra.mxu0 0
        %624 = vmatpush.bf16.msra.mxu0 0
        %625 = vmatpush.bf16.msra.mxu0 0
        %626 = vmatpush.bf16.msra.mxu0 0
        %627 = vmatpush.bf16.msra.mxu0 %v559
        %628 = vmatpush.bf16.msra.mxu0 %v555
        %629 = vmatmul.bf16.gmra.mxu0 %v605
        %v630 = vpop.f32.mrf.mxu0
        %v631 = vadd.f32 %v617, %v630
        %v632 = vpop.f32.mrf.mxu0
        %v633 = vadd.f32 %v619, %v632
        %634 = vdwg.mxu0
        %635 = vmatpush.bf16.msra.mxu0 %v552
        %636 = vmatpush.bf16.msra.mxu0 %v548
        %637 = vmatpush.bf16.msra.mxu0 %v544
        %638 = vmatpush.bf16.msra.mxu0 %v540
        %639 = vmatpush.bf16.msra.mxu0 %v536
        %640 = vmatpush.bf16.msra.mxu0 %v532
        %641 = vmatpush.bf16.msra.mxu0 %v528
        %642 = vmatpush.bf16.msra.mxu0 %v524
        %643 = vmatmul.bf16.gmra.mxu0 %v389
        %v644 = vpop.f32.mrf.mxu0
        %v645 = vadd.f32 0.0, %v644
        %v646 = vpop.f32.mrf.mxu0
        %v647 = vadd.f32 0.0, %v646
        %648 = vdwg.mxu0
        %649 = vmatpush.bf16.msra.mxu0 0
        %650 = vmatpush.bf16.msra.mxu0 0
        %651 = vmatpush.bf16.msra.mxu0 0
        %652 = vmatpush.bf16.msra.mxu0 0
        %653 = vmatpush.bf16.msra.mxu0 0
        %654 = vmatpush.bf16.msra.mxu0 0
        %655 = vmatpush.bf16.msra.mxu0 %v560
        %656 = vmatpush.bf16.msra.mxu0 %v556
        %657 = vmatmul.bf16.gmra.mxu0 %v605
        %v658 = vpop.f32.mrf.mxu0
        %v659 = vadd.f32 %v645, %v658
        %v660 = vpop.f32.mrf.mxu0
        %v661 = vadd.f32 %v647, %v660
        %662 = vdwg.mxu0
        %663 = vmatpush.bf16.msra.mxu0 %v553
        %664 = vmatpush.bf16.msra.mxu0 %v549
        %665 = vmatpush.bf16.msra.mxu0 %v545
        %666 = vmatpush.bf16.msra.mxu0 %v541
        %667 = vmatpush.bf16.msra.mxu0 %v537
        %668 = vmatpush.bf16.msra.mxu0 %v533
        %669 = vmatpush.bf16.msra.mxu0 %v529
        %670 = vmatpush.bf16.msra.mxu0 %v525
        %671 = vmatmul.bf16.gmra.mxu0 %v389
        %v672 = vpop.f32.mrf.mxu0
        %v673 = vadd.f32 0.0, %v672
        %v674 = vpop.f32.mrf.mxu0
        %v675 = vadd.f32 0.0, %v674
        %676 = vdwg.mxu0
        %677 = vmatpush.bf16.msra.mxu0 0
        %678 = vmatpush.bf16.msra.mxu0 0
        %679 = vmatpush.bf16.msra.mxu0 0
        %680 = vmatpush.bf16.msra.mxu0 0
        %681 = vmatpush.bf16.msra.mxu0 0
        %682 = vmatpush.bf16.msra.mxu0 0
        %683 = vmatpush.bf16.msra.mxu0 %v561
        %684 = vmatpush.bf16.msra.mxu0 %v557
        %685 = vmatmul.bf16.gmra.mxu0 %v605
        %v686 = vpop.f32.mrf.mxu0
        %v687 = vadd.f32 %v673, %v686
        %v688 = vpop.f32.mrf.mxu0
        %v689 = vadd.f32 %v675, %v688
        %690 = vdwg.mxu0
        %691 = vmatpush.bf16.msra.mxu0 %v554
        %692 = vmatpush.bf16.msra.mxu0 %v550
        %693 = vmatpush.bf16.msra.mxu0 %v546
        %694 = vmatpush.bf16.msra.mxu0 %v542
        %695 = vmatpush.bf16.msra.mxu0 %v538
        %696 = vmatpush.bf16.msra.mxu0 %v534
        %697 = vmatpush.bf16.msra.mxu0 %v530
        %698 = vmatpush.bf16.msra.mxu0 %v526
        %699 = vmatmul.bf16.gmra.mxu0 %v389
        %v700 = vpop.f32.mrf.mxu0
        %v701 = vadd.f32 0.0, %v700
        %v702 = vpop.f32.mrf.mxu0
        %v703 = vadd.f32 0.0, %v702
        %704 = vdwg.mxu0
        %705 = vmatpush.bf16.msra.mxu0 0
        %706 = vmatpush.bf16.msra.mxu0 0
        %707 = vmatpush.bf16.msra.mxu0 0
        %708 = vmatpush.bf16.msra.mxu0 0
        %709 = vmatpush.bf16.msra.mxu0 0
        %710 = vmatpush.bf16.msra.mxu0 0
        %711 = vmatpush.bf16.msra.mxu0 %v562
        %712 = vmatpush.bf16.msra.mxu0 %v558
        %713 = vmatmul.bf16.gmra.mxu0 %v605
        %v714 = vpop.f32.mrf.mxu0
        %v715 = vadd.f32 %v701, %v714
        %v716 = vpop.f32.mrf.mxu0
        %v717 = vadd.f32 %v703, %v716
        %718 = vdwg.mxu0
        %v721 = vunpack.c.l.b16 %v283
        %v722 = vunpack.c.h.b16 %v283
        %v723 = vunpack.c.l.b16 %v284
        %v724 = vunpack.c.h.b16 %v284
        %v725 = vpack.c.b16 %v723, %v721
        %v726 = vpack.c.b16 %v724, %v722
        %v768 = vunpack.c.l.b16 %v292
        %v769 = vunpack.c.h.b16 %v292
        %v770 = vunpack.c.l.b16 %v293
        %v771 = vunpack.c.h.b16 %v293
        %v772 = vunpack.c.l.b16 %v294
        %v773 = vunpack.c.h.b16 %v294
        %v774 = vunpack.c.l.b16 %v295
        %v775 = vunpack.c.h.b16 %v295
        %v776 = vunpack.c.l.b16 %v296
        %v777 = vunpack.c.h.b16 %v296
        %v778 = vunpack.c.l.b16 %v297
        %v779 = vunpack.c.h.b16 %v297
        %v780 = vunpack.c.l.b16 %v298
        %v781 = vunpack.c.h.b16 %v298
        %v782 = vunpack.c.l.b16 %v299
        %v783 = vunpack.c.h.b16 %v299
        %v784 = vunpack.c.l.b16 %v300
        %v785 = vunpack.c.h.b16 %v300
        %v786 = vunpack.c.l.b16 %v301
        %v787 = vunpack.c.h.b16 %v301
        %v788 = vunpack.c.l.b16 %v302
        %v789 = vunpack.c.h.b16 %v302
        %v790 = vunpack.c.l.b16 %v303
        %v791 = vunpack.c.h.b16 %v303
        %v792 = vunpack.c.l.b16 %v304
        %v793 = vunpack.c.h.b16 %v304
        %v794 = vunpack.c.l.b16 %v305
        %v795 = vunpack.c.h.b16 %v305
        %v796 = vunpack.c.l.b16 %v306
        %v797 = vunpack.c.h.b16 %v306
        %v798 = vunpack.c.l.b16 %v307
        %v799 = vunpack.c.h.b16 %v307
        %v800 = vunpack.c.l.b16 %v308
        %v801 = vunpack.c.h.b16 %v308
        %v802 = vunpack.c.l.b16 %v309
        %v803 = vunpack.c.h.b16 %v309
        %v804 = vunpack.c.l.b16 %v310
        %v805 = vunpack.c.h.b16 %v310
        %v806 = vunpack.c.l.b16 %v311
        %v807 = vunpack.c.h.b16 %v311
        %v808 = vunpack.c.l.b16 %v312
        %v809 = vunpack.c.h.b16 %v312
        %v810 = vunpack.c.l.b16 %v313
        %v811 = vunpack.c.h.b16 %v313
        %v812 = vunpack.c.l.b16 %v314
        %v813 = vunpack.c.h.b16 %v314
        %v814 = vunpack.c.l.b16 %v315
        %v815 = vunpack.c.h.b16 %v315
        %v816 = vunpack.c.l.b16 %v316
        %v817 = vunpack.c.h.b16 %v316
        %v818 = vunpack.c.l.b16 %v317
        %v819 = vunpack.c.h.b16 %v317
        %v820 = vunpack.c.l.b16 %v318
        %v821 = vunpack.c.h.b16 %v318
        %v822 = vunpack.c.l.b16 %v319
        %v823 = vunpack.c.h.b16 %v319
        %v824 = vunpack.c.l.b16 %v320
        %v825 = vunpack.c.h.b16 %v320
        %v826 = vunpack.c.l.b16 %v321
        %v827 = vunpack.c.h.b16 %v321
        %v828 = vunpack.c.l.b16 %v322
        %v829 = vunpack.c.h.b16 %v322
        %v830 = vunpack.c.l.b16 %v323
        %v831 = vunpack.c.h.b16 %v323
        %v832 = vunpack.c.l.b16 %v324
        %v833 = vunpack.c.h.b16 %v324
        %v834 = vunpack.c.l.b16 %v325
        %v835 = vunpack.c.h.b16 %v325
        %v836 = vunpack.c.l.b16 %v326
        %v837 = vunpack.c.h.b16 %v326
        %v838 = vunpack.c.l.b16 %v327
        %v839 = vunpack.c.h.b16 %v327
        %v840 = vunpack.c.l.b16 %v328
        %v841 = vunpack.c.h.b16 %v328
        %v842 = vunpack.c.l.b16 %v329
        %v843 = vunpack.c.h.b16 %v329
        %v844 = vunpack.c.l.b16 %v330
        %v845 = vunpack.c.h.b16 %v330
        %v846 = vunpack.c.l.b16 %v331
        %v847 = vunpack.c.h.b16 %v331
        %v848 = vpack.c.b16 %v772, %v768
        %v849 = vpack.c.b16 %v773, %v769
        %v850 = vpack.c.b16 %v774, %v770
        %v851 = vpack.c.b16 %v775, %v771
        %v852 = vpack.c.b16 %v780, %v776
        %v853 = vpack.c.b16 %v781, %v777
        %v854 = vpack.c.b16 %v782, %v778
        %v855 = vpack.c.b16 %v783, %v779
        %v856 = vpack.c.b16 %v788, %v784
        %v857 = vpack.c.b16 %v789, %v785
        %v858 = vpack.c.b16 %v790, %v786
        %v859 = vpack.c.b16 %v791, %v787
        %v860 = vpack.c.b16 %v796, %v792
        %v861 = vpack.c.b16 %v797, %v793
        %v862 = vpack.c.b16 %v798, %v794
        %v863 = vpack.c.b16 %v799, %v795
        %v864 = vpack.c.b16 %v804, %v800
        %v865 = vpack.c.b16 %v805, %v801
        %v866 = vpack.c.b16 %v806, %v802
        %v867 = vpack.c.b16 %v807, %v803
        %v868 = vpack.c.b16 %v812, %v808
        %v869 = vpack.c.b16 %v813, %v809
        %v870 = vpack.c.b16 %v814, %v810
        %v871 = vpack.c.b16 %v815, %v811
        %v872 = vpack.c.b16 %v820, %v816
        %v873 = vpack.c.b16 %v821, %v817
        %v874 = vpack.c.b16 %v822, %v818
        %v875 = vpack.c.b16 %v823, %v819
        %v876 = vpack.c.b16 %v828, %v824
        %v877 = vpack.c.b16 %v829, %v825
        %v878 = vpack.c.b16 %v830, %v826
        %v879 = vpack.c.b16 %v831, %v827
        %v880 = vpack.c.b16 %v836, %v832
        %v881 = vpack.c.b16 %v837, %v833
        %v882 = vpack.c.b16 %v838, %v834
        %v883 = vpack.c.b16 %v839, %v835
        %v884 = vpack.c.b16 %v844, %v840
        %v885 = vpack.c.b16 %v845, %v841
        %v886 = vpack.c.b16 %v846, %v842
        %v887 = vpack.c.b16 %v847, %v843
        %v929 = vsel %vm603, %v726, 0
        %931 = vmatpush.bf16.msra.mxu0 %v876
        %932 = vmatpush.bf16.msra.mxu0 %v872
        %933 = vmatpush.bf16.msra.mxu0 %v868
        %934 = vmatpush.bf16.msra.mxu0 %v864
        %935 = vmatpush.bf16.msra.mxu0 %v860
        %936 = vmatpush.bf16.msra.mxu0 %v856
        %937 = vmatpush.bf16.msra.mxu0 %v852
        %938 = vmatpush.bf16.msra.mxu0 %v848
        %939 = vmatmul.bf16.gmra.mxu0 %v725
        %v940 = vpop.f32.mrf.mxu0
        %v941 = vadd.f32 %v631, %v940
        %v942 = vpop.f32.mrf.mxu0
        %v943 = vadd.f32 %v633, %v942
        %944 = vdwg.mxu0
        %945 = vmatpush.bf16.msra.mxu0 0
        %946 = vmatpush.bf16.msra.mxu0 0
        %947 = vmatpush.bf16.msra.mxu0 0
        %948 = vmatpush.bf16.msra.mxu0 0
        %949 = vmatpush.bf16.msra.mxu0 0
        %950 = vmatpush.bf16.msra.mxu0 0
        %951 = vmatpush.bf16.msra.mxu0 %v884
        %952 = vmatpush.bf16.msra.mxu0 %v880
        %953 = vmatmul.bf16.gmra.mxu0 %v929
        %v954 = vpop.f32.mrf.mxu0
        %v955 = vadd.f32 %v941, %v954
        %v956 = vpop.f32.mrf.mxu0
        %v957 = vadd.f32 %v943, %v956
        %958 = vdwg.mxu0
        %959 = vmatpush.bf16.msra.mxu0 %v877
        %960 = vmatpush.bf16.msra.mxu0 %v873
        %961 = vmatpush.bf16.msra.mxu0 %v869
        %962 = vmatpush.bf16.msra.mxu0 %v865
        %963 = vmatpush.bf16.msra.mxu0 %v861
        %964 = vmatpush.bf16.msra.mxu0 %v857
        %965 = vmatpush.bf16.msra.mxu0 %v853
        %966 = vmatpush.bf16.msra.mxu0 %v849
        %967 = vmatmul.bf16.gmra.mxu0 %v725
        %v968 = vpop.f32.mrf.mxu0
        %v969 = vadd.f32 %v659, %v968
        %v970 = vpop.f32.mrf.mxu0
        %v971 = vadd.f32 %v661, %v970
        %972 = vdwg.mxu0
        %973 = vmatpush.bf16.msra.mxu0 0
        %974 = vmatpush.bf16.msra.mxu0 0
        %975 = vmatpush.bf16.msra.mxu0 0
        %976 = vmatpush.bf16.msra.mxu0 0
        %977 = vmatpush.bf16.msra.mxu0 0
        %978 = vmatpush.bf16.msra.mxu0 0
        %979 = vmatpush.bf16.msra.mxu0 %v885
        %980 = vmatpush.bf16.msra.mxu0 %v881
        %981 = vmatmul.bf16.gmra.mxu0 %v929
        %v982 = vpop.f32.mrf.mxu0
        %v983 = vadd.f32 %v969, %v982
        %v984 = vpop.f32.mrf.mxu0
        %v985 = vadd.f32 %v971, %v984
        %986 = vdwg.mxu0
        %987 = vmatpush.bf16.msra.mxu0 %v878
        %988 = vmatpush.bf16.msra.mxu0 %v874
        %989 = vmatpush.bf16.msra.mxu0 %v870
        %990 = vmatpush.bf16.msra.mxu0 %v866
        %991 = vmatpush.bf16.msra.mxu0 %v862
        %992 = vmatpush.bf16.msra.mxu0 %v858
        %993 = vmatpush.bf16.msra.mxu0 %v854
        %994 = vmatpush.bf16.msra.mxu0 %v850
        %995 = vmatmul.bf16.gmra.mxu0 %v725
        %v996 = vpop.f32.mrf.mxu0
        %v997 = vadd.f32 %v687, %v996
        %v998 = vpop.f32.mrf.mxu0
        %v999 = vadd.f32 %v689, %v998
        %1000 = vdwg.mxu0
        %1001 = vmatpush.bf16.msra.mxu0 0
        %1002 = vmatpush.bf16.msra.mxu0 0
        %1003 = vmatpush.bf16.msra.mxu0 0
        %1004 = vmatpush.bf16.msra.mxu0 0
        %1005 = vmatpush.bf16.msra.mxu0 0
        %1006 = vmatpush.bf16.msra.mxu0 0
        %1007 = vmatpush.bf16.msra.mxu0 %v886
        %1008 = vmatpush.bf16.msra.mxu0 %v882
        %1009 = vmatmul.bf16.gmra.mxu0 %v929
        %v1010 = vpop.f32.mrf.mxu0
        %v1011 = vadd.f32 %v997, %v1010
        %v1012 = vpop.f32.mrf.mxu0
        %v1013 = vadd.f32 %v999, %v1012
        %1014 = vdwg.mxu0
        %1015 = vmatpush.bf16.msra.mxu0 %v879
        %1016 = vmatpush.bf16.msra.mxu0 %v875
        %1017 = vmatpush.bf16.msra.mxu0 %v871
        %1018 = vmatpush.bf16.msra.mxu0 %v867
        %1019 = vmatpush.bf16.msra.mxu0 %v863
        %1020 = vmatpush.bf16.msra.mxu0 %v859
        %1021 = vmatpush.bf16.msra.mxu0 %v855
        %1022 = vmatpush.bf16.msra.mxu0 %v851
        %1023 = vmatmul.bf16.gmra.mxu0 %v725
        %v1024 = vpop.f32.mrf.mxu0
        %v1025 = vadd.f32 %v715, %v1024
        %v1026 = vpop.f32.mrf.mxu0
        %v1027 = vadd.f32 %v717, %v1026
        %1028 = vdwg.mxu0
        %1029 = vmatpush.bf16.msra.mxu0 0
        %1030 = vmatpush.bf16.msra.mxu0 0
        %1031 = vmatpush.bf16.msra.mxu0 0
        %1032 = vmatpush.bf16.msra.mxu0 0
        %1033 = vmatpush.bf16.msra.mxu0 0
        %1034 = vmatpush.bf16.msra.mxu0 0
        %1035 = vmatpush.bf16.msra.mxu0 %v887
        %1036 = vmatpush.bf16.msra.mxu0 %v883
        %1037 = vmatmul.bf16.gmra.mxu0 %v929
        %v1038 = vpop.f32.mrf.mxu0
        %v1039 = vadd.f32 %v1025, %v1038
        %v1040 = vpop.f32.mrf.mxu0
        %v1041 = vadd.f32 %v1027, %v1040
        %1042 = vdwg.mxu0
        %s1043 = scalar_lea.vmem [#allocation2], 640
        %v1044 = vld [vmem:[%s1043] sm:$0xff]
        %v1045 = vld [vmem:[%s1043 + $0x8] sm:$0xff]
        %v1046 = vld [vmem:[%s1043 + $0x10] sm:$0xff]
        %v1047 = vld [vmem:[%s1043 + $0x18] sm:$0xff]
        %v1048 = vld [vmem:[%s1043 + $0x20] sm:$0xff]
        %v1049 = vld [vmem:[%s1043 + $0x28] sm:$0xff]
        %v1050 = vld [vmem:[%s1043 + $0x30] sm:$0xff]
        %v1051 = vld [vmem:[%s1043 + $0x38] sm:$0xff]
        %v1052 = vld [vmem:[%s1043 + $0x40] sm:$0xff]
        %v1053 = vld [vmem:[%s1043 + $0x48] sm:$0xff]
        %v1054 = vld [vmem:[%s1043 + $0x50] sm:$0xff]
        %v1055 = vld [vmem:[%s1043 + $0x58] sm:$0xff]
        %v1056 = vld [vmem:[%s1043 + $0x60] sm:$0xff]
        %v1057 = vld [vmem:[%s1043 + $0x68] sm:$0xff]
        %v1058 = vld [vmem:[%s1043 + $0x70] sm:$0xff]
        %v1059 = vld [vmem:[%s1043 + $0x78] sm:$0xff]
        %v1060 = vld [vmem:[%s1043 + $0x80] sm:$0xff]
        %v1061 = vld [vmem:[%s1043 + $0x88] sm:$0xff]
        %v1062 = vld [vmem:[%s1043 + $0x90] sm:$0xff]
        %v1063 = vld [vmem:[%s1043 + $0x98] sm:$0xff]
        %v1064 = vld [vmem:[%s1043 + $0xa0] sm:$0xff]
        %v1065 = vld [vmem:[%s1043 + $0xa8] sm:$0xff]
        %v1066 = vld [vmem:[%s1043 + $0xb0] sm:$0xff]
        %v1067 = vld [vmem:[%s1043 + $0xb8] sm:$0xff]
        %v1068 = vld [vmem:[%s1043 + $0xc0] sm:$0xff]
        %v1069 = vld [vmem:[%s1043 + $0xc8] sm:$0xff]
        %v1070 = vld [vmem:[%s1043 + $0xd0] sm:$0xff]
        %v1071 = vld [vmem:[%s1043 + $0xd8] sm:$0xff]
        %v1072 = vld [vmem:[%s1043 + $0xe0] sm:$0xff]
        %v1073 = vld [vmem:[%s1043 + $0xe8] sm:$0xff]
        %v1074 = vld [vmem:[%s1043 + $0xf0] sm:$0xff]
        %v1075 = vld [vmem:[%s1043 + $0xf8] sm:$0xff]
        %v1076 = vld [vmem:[%s1043 + $0x100] sm:$0xff]
        %v1077 = vld [vmem:[%s1043 + $0x108] sm:$0xff]
        %v1078 = vld [vmem:[%s1043 + $0x110] sm:$0xff]
        %v1079 = vld [vmem:[%s1043 + $0x118] sm:$0xff]
        %v1080 = vld [vmem:[%s1043 + $0x120] sm:$0xff]
        %v1081 = vld [vmem:[%s1043 + $0x128] sm:$0xff]
        %v1082 = vld [vmem:[%s1043 + $0x130] sm:$0xff]
        %v1083 = vld [vmem:[%s1043 + $0x138] sm:$0xff]
        %vm1088 = vcmask 1046528
        %v1089 = vrot.slane %v332, 1
        %v1090 = vrot.slane %v334, 1
        %v1091 = vsel %vm1088, %v1089, %v1090
        %v1092 = vrot.slane %v333, 1
        %v1093 = vrot.slane %v335, 1
        %v1094 = vsel %vm1088, %v1092, %v1093
        %v1136 = vunpack.c.l.b16 %v1044
        %v1137 = vunpack.c.h.b16 %v1044
        %v1138 = vunpack.c.l.b16 %v1045
        %v1139 = vunpack.c.h.b16 %v1045
        %v1140 = vunpack.c.l.b16 %v1046
        %v1141 = vunpack.c.h.b16 %v1046
        %v1142 = vunpack.c.l.b16 %v1047
        %v1143 = vunpack.c.h.b16 %v1047
        %v1144 = vunpack.c.l.b16 %v1048
        %v1145 = vunpack.c.h.b16 %v1048
        %v1146 = vunpack.c.l.b16 %v1049
        %v1147 = vunpack.c.h.b16 %v1049
        %v1148 = vunpack.c.l.b16 %v1050
        %v1149 = vunpack.c.h.b16 %v1050
        %v1150 = vunpack.c.l.b16 %v1051
        %v1151 = vunpack.c.h.b16 %v1051
        %v1152 = vunpack.c.l.b16 %v1052
        %v1153 = vunpack.c.h.b16 %v1052
        %v1154 = vunpack.c.l.b16 %v1053
        %v1155 = vunpack.c.h.b16 %v1053
        %v1156 = vunpack.c.l.b16 %v1054
        %v1157 = vunpack.c.h.b16 %v1054
        %v1158 = vunpack.c.l.b16 %v1055
        %v1159 = vunpack.c.h.b16 %v1055
        %v1160 = vunpack.c.l.b16 %v1056
        %v1161 = vunpack.c.h.b16 %v1056
        %v1162 = vunpack.c.l.b16 %v1057
        %v1163 = vunpack.c.h.b16 %v1057
        %v1164 = vunpack.c.l.b16 %v1058
        %v1165 = vunpack.c.h.b16 %v1058
        %v1166 = vunpack.c.l.b16 %v1059
        %v1167 = vunpack.c.h.b16 %v1059
        %v1168 = vunpack.c.l.b16 %v1060
        %v1169 = vunpack.c.h.b16 %v1060
        %v1170 = vunpack.c.l.b16 %v1061
        %v1171 = vunpack.c.h.b16 %v1061
        %v1172 = vunpack.c.l.b16 %v1062
        %v1173 = vunpack.c.h.b16 %v1062
        %v1174 = vunpack.c.l.b16 %v1063
        %v1175 = vunpack.c.h.b16 %v1063
        %v1176 = vunpack.c.l.b16 %v1064
        %v1177 = vunpack.c.h.b16 %v1064
        %v1178 = vunpack.c.l.b16 %v1065
        %v1179 = vunpack.c.h.b16 %v1065
        %v1180 = vunpack.c.l.b16 %v1066
        %v1181 = vunpack.c.h.b16 %v1066
        %v1182 = vunpack.c.l.b16 %v1067
        %v1183 = vunpack.c.h.b16 %v1067
        %v1184 = vunpack.c.l.b16 %v1068
        %v1185 = vunpack.c.h.b16 %v1068
        %v1186 = vunpack.c.l.b16 %v1069
        %v1187 = vunpack.c.h.b16 %v1069
        %v1188 = vunpack.c.l.b16 %v1070
        %v1189 = vunpack.c.h.b16 %v1070
        %v1190 = vunpack.c.l.b16 %v1071
        %v1191 = vunpack.c.h.b16 %v1071
        %v1192 = vunpack.c.l.b16 %v1072
        %v1193 = vunpack.c.h.b16 %v1072
        %v1194 = vunpack.c.l.b16 %v1073
        %v1195 = vunpack.c.h.b16 %v1073
        %v1196 = vunpack.c.l.b16 %v1074
        %v1197 = vunpack.c.h.b16 %v1074
        %v1198 = vunpack.c.l.b16 %v1075
        %v1199 = vunpack.c.h.b16 %v1075
        %v1200 = vunpack.c.l.b16 %v1076
        %v1201 = vunpack.c.h.b16 %v1076
        %v1202 = vunpack.c.l.b16 %v1077
        %v1203 = vunpack.c.h.b16 %v1077
        %v1204 = vunpack.c.l.b16 %v1078
        %v1205 = vunpack.c.h.b16 %v1078
        %v1206 = vunpack.c.l.b16 %v1079
        %v1207 = vunpack.c.h.b16 %v1079
        %v1208 = vunpack.c.l.b16 %v1080
        %v1209 = vunpack.c.h.b16 %v1080
        %v1210 = vunpack.c.l.b16 %v1081
        %v1211 = vunpack.c.h.b16 %v1081
        %v1212 = vunpack.c.l.b16 %v1082
        %v1213 = vunpack.c.h.b16 %v1082
        %v1214 = vunpack.c.l.b16 %v1083
        %v1215 = vunpack.c.h.b16 %v1083
        %v1216 = vpack.c.b16 %v1140, %v1136
        %v1217 = vpack.c.b16 %v1141, %v1137
        %v1218 = vpack.c.b16 %v1142, %v1138
        %v1219 = vpack.c.b16 %v1143, %v1139
        %v1220 = vpack.c.b16 %v1148, %v1144
        %v1221 = vpack.c.b16 %v1149, %v1145
        %v1222 = vpack.c.b16 %v1150, %v1146
        %v1223 = vpack.c.b16 %v1151, %v1147
        %v1224 = vpack.c.b16 %v1156, %v1152
        %v1225 = vpack.c.b16 %v1157, %v1153
        %v1226 = vpack.c.b16 %v1158, %v1154
        %v1227 = vpack.c.b16 %v1159, %v1155
        %v1228 = vpack.c.b16 %v1164, %v1160
        %v1229 = vpack.c.b16 %v1165, %v1161
        %v1230 = vpack.c.b16 %v1166, %v1162
        %v1231 = vpack.c.b16 %v1167, %v1163
        %v1232 = vpack.c.b16 %v1172, %v1168
        %v1233 = vpack.c.b16 %v1173, %v1169
        %v1234 = vpack.c.b16 %v1174, %v1170
        %v1235 = vpack.c.b16 %v1175, %v1171
        %v1236 = vpack.c.b16 %v1180, %v1176
        %v1237 = vpack.c.b16 %v1181, %v1177
        %v1238 = vpack.c.b16 %v1182, %v1178
        %v1239 = vpack.c.b16 %v1183, %v1179
        %v1240 = vpack.c.b16 %v1188, %v1184
        %v1241 = vpack.c.b16 %v1189, %v1185
        %v1242 = vpack.c.b16 %v1190, %v1186
        %v1243 = vpack.c.b16 %v1191, %v1187
        %v1244 = vpack.c.b16 %v1196, %v1192
        %v1245 = vpack.c.b16 %v1197, %v1193
        %v1246 = vpack.c.b16 %v1198, %v1194
        %v1247 = vpack.c.b16 %v1199, %v1195
        %v1248 = vpack.c.b16 %v1204, %v1200
        %v1249 = vpack.c.b16 %v1205, %v1201
        %v1250 = vpack.c.b16 %v1206, %v1202
        %v1251 = vpack.c.b16 %v1207, %v1203
        %v1252 = vpack.c.b16 %v1212, %v1208
        %v1253 = vpack.c.b16 %v1213, %v1209
        %v1254 = vpack.c.b16 %v1214, %v1210
        %v1255 = vpack.c.b16 %v1215, %v1211
        %v1297 = vsel %vm603, %v1094, 0
        %1299 = vmatpush.bf16.msra.mxu0 %v1244
        %1300 = vmatpush.bf16.msra.mxu0 %v1240
        %1301 = vmatpush.bf16.msra.mxu0 %v1236
        %1302 = vmatpush.bf16.msra.mxu0 %v1232
        %1303 = vmatpush.bf16.msra.mxu0 %v1228
        %1304 = vmatpush.bf16.msra.mxu0 %v1224
        %1305 = vmatpush.bf16.msra.mxu0 %v1220
        %1306 = vmatpush.bf16.msra.mxu0 %v1216
        %1307 = vmatmul.bf16.gmra.mxu0 %v1091
        %v1308 = vpop.f32.mrf.mxu0
        %v1309 = vadd.f32 0.0, %v1308
        %v1310 = vpop.f32.mrf.mxu0
        %v1311 = vadd.f32 0.0, %v1310
        %1312 = vdwg.mxu0
        %1313 = vmatpush.bf16.msra.mxu0 0
        %1314 = vmatpush.bf16.msra.mxu0 0
        %1315 = vmatpush.bf16.msra.mxu0 0
        %1316 = vmatpush.bf16.msra.mxu0 0
        %1317 = vmatpush.bf16.msra.mxu0 0
        %1318 = vmatpush.bf16.msra.mxu0 0
        %1319 = vmatpush.bf16.msra.mxu0 %v1252
        %1320 = vmatpush.bf16.msra.mxu0 %v1248
        %1321 = vmatmul.bf16.gmra.mxu0 %v1297
        %v1322 = vpop.f32.mrf.mxu0
        %v1323 = vadd.f32 %v1309, %v1322
        %v1324 = vpop.f32.mrf.mxu0
        %v1325 = vadd.f32 %v1311, %v1324
        %1326 = vdwg.mxu0
        %1327 = vmatpush.bf16.msra.mxu0 %v1245
        %1328 = vmatpush.bf16.msra.mxu0 %v1241
        %1329 = vmatpush.bf16.msra.mxu0 %v1237
        %1330 = vmatpush.bf16.msra.mxu0 %v1233
        %1331 = vmatpush.bf16.msra.mxu0 %v1229
        %1332 = vmatpush.bf16.msra.mxu0 %v1225
        %1333 = vmatpush.bf16.msra.mxu0 %v1221
        %1334 = vmatpush.bf16.msra.mxu0 %v1217
        %1335 = vmatmul.bf16.gmra.mxu0 %v1091
        %v1336 = vpop.f32.mrf.mxu0
        %v1337 = vadd.f32 0.0, %v1336
        %v1338 = vpop.f32.mrf.mxu0
        %v1339 = vadd.f32 0.0, %v1338
        %1340 = vdwg.mxu0
        %1341 = vmatpush.bf16.msra.mxu0 0
        %1342 = vmatpush.bf16.msra.mxu0 0
        %1343 = vmatpush.bf16.msra.mxu0 0
        %1344 = vmatpush.bf16.msra.mxu0 0
        %1345 = vmatpush.bf16.msra.mxu0 0
        %1346 = vmatpush.bf16.msra.mxu0 0
        %1347 = vmatpush.bf16.msra.mxu0 %v1253
        %1348 = vmatpush.bf16.msra.mxu0 %v1249
        %1349 = vmatmul.bf16.gmra.mxu0 %v1297
        %v1350 = vpop.f32.mrf.mxu0
        %v1351 = vadd.f32 %v1337, %v1350
        %v1352 = vpop.f32.mrf.mxu0
        %v1353 = vadd.f32 %v1339, %v1352
        %1354 = vdwg.mxu0
        %1355 = vmatpush.bf16.msra.mxu0 %v1246
        %1356 = vmatpush.bf16.msra.mxu0 %v1242
        %1357 = vmatpush.bf16.msra.mxu0 %v1238
        %1358 = vmatpush.bf16.msra.mxu0 %v1234
        %1359 = vmatpush.bf16.msra.mxu0 %v1230
        %1360 = vmatpush.bf16.msra.mxu0 %v1226
        %1361 = vmatpush.bf16.msra.mxu0 %v1222
        %1362 = vmatpush.bf16.msra.mxu0 %v1218
        %1363 = vmatmul.bf16.gmra.mxu0 %v1091
        %v1364 = vpop.f32.mrf.mxu0
        %v1365 = vadd.f32 0.0, %v1364
        %v1366 = vpop.f32.mrf.mxu0
        %v1367 = vadd.f32 0.0, %v1366
        %1368 = vdwg.mxu0
        %1369 = vmatpush.bf16.msra.mxu0 0
        %1370 = vmatpush.bf16.msra.mxu0 0
        %1371 = vmatpush.bf16.msra.mxu0 0
        %1372 = vmatpush.bf16.msra.mxu0 0
        %1373 = vmatpush.bf16.msra.mxu0 0
        %1374 = vmatpush.bf16.msra.mxu0 0
        %1375 = vmatpush.bf16.msra.mxu0 %v1254
        %1376 = vmatpush.bf16.msra.mxu0 %v1250
        %1377 = vmatmul.bf16.gmra.mxu0 %v1297
        %v1378 = vpop.f32.mrf.mxu0
        %v1379 = vadd.f32 %v1365, %v1378
        %v1380 = vpop.f32.mrf.mxu0
        %v1381 = vadd.f32 %v1367, %v1380
        %1382 = vdwg.mxu0
        %1383 = vmatpush.bf16.msra.mxu0 %v1247
        %1384 = vmatpush.bf16.msra.mxu0 %v1243
        %1385 = vmatpush.bf16.msra.mxu0 %v1239
        %1386 = vmatpush.bf16.msra.mxu0 %v1235
        %1387 = vmatpush.bf16.msra.mxu0 %v1231
        %1388 = vmatpush.bf16.msra.mxu0 %v1227
        %1389 = vmatpush.bf16.msra.mxu0 %v1223
        %1390 = vmatpush.bf16.msra.mxu0 %v1219
        %1391 = vmatmul.bf16.gmra.mxu0 %v1091
        %v1392 = vpop.f32.mrf.mxu0
        %v1393 = vadd.f32 0.0, %v1392
        %v1394 = vpop.f32.mrf.mxu0
        %v1395 = vadd.f32 0.0, %v1394
        %1396 = vdwg.mxu0
        %1397 = vmatpush.bf16.msra.mxu0 0
        %1398 = vmatpush.bf16.msra.mxu0 0
        %1399 = vmatpush.bf16.msra.mxu0 0
        %1400 = vmatpush.bf16.msra.mxu0 0
        %1401 = vmatpush.bf16.msra.mxu0 0
        %1402 = vmatpush.bf16.msra.mxu0 0
        %1403 = vmatpush.bf16.msra.mxu0 %v1255
        %1404 = vmatpush.bf16.msra.mxu0 %v1251
        %1405 = vmatmul.bf16.gmra.mxu0 %v1297
        %v1406 = vpop.f32.mrf.mxu0
        %v1407 = vadd.f32 %v1393, %v1406
        %v1408 = vpop.f32.mrf.mxu0
        %v1409 = vadd.f32 %v1395, %v1408
        %1410 = vdwg.mxu0
        %v1411 = vadd.f32 %v955, %v1323
        %v1412 = vadd.f32 %v983, %v1351
        %v1413 = vadd.f32 %v1011, %v1379
        %v1414 = vadd.f32 %v1039, %v1407
        %v1415 = vadd.f32 %v957, %v1325
        %v1416 = vadd.f32 %v985, %v1353
        %v1417 = vadd.f32 %v1013, %v1381
        %v1418 = vadd.f32 %v1041, %v1409
        %v1419 = vmul.f32 %v1411, %v1411
        %v1420 = vmul.f32 %v1412, %v1412
        %v1421 = vmul.f32 %v1415, %v1415
        %v1422 = vmul.f32 %v1416, %v1416
        %v1423 = vmul.f32 %v1413, %v1413
        %v1424 = vmul.f32 %v1414, %v1414
        %v1425 = vmul.f32 %v1417, %v1417
        %v1426 = vmul.f32 %v1418, %v1418
        %v1427 = vadd.f32 %v1419, %v1423
        %v1428 = vadd.f32 %v1420, %v1424
        %v1429 = vadd.f32 %v1421, %v1425
        %v1430 = vadd.f32 %v1422, %v1426
        %v1431 = vpack.c.bf16 %v1429, %v1427
        %v1432 = vpack.c.bf16 %v1430, %v1428
        %v1433 = vld [vmem:[%s3] sm:$0xf]
        %v1434 = vld [vmem:[%s3 + $0x4] sm:$0xf]
        %v1435 = vld [vmem:[%s3 + $0x8] sm:$0xf]
        %v1436 = vld [vmem:[%s3 + $0xc] sm:$0xf]
        %v1437 = vld [vmem:[%s3 + $0x10] sm:$0xf]
        %v1438 = vld [vmem:[%s3 + $0x14] sm:$0xf]
        %v1439 = vld [vmem:[%s3 + $0x18] sm:$0xf]
        %v1440 = vld [vmem:[%s3 + $0x1c] sm:$0xf]
        %v1441 = vld [vmem:[%s3 + $0x20] sm:$0xf]
        %v1442 = vld [vmem:[%s3 + $0x24] sm:$0xf]
        %v1443 = vld [vmem:[%s3 + $0x28] sm:$0xf]
        %v1444 = vld [vmem:[%s3 + $0x2c] sm:$0xf]
        %v1445 = vld [vmem:[%s3 + $0x30] sm:$0xf]
        %v1446 = vld [vmem:[%s3 + $0x34] sm:$0xf]
        %v1447 = vld [vmem:[%s3 + $0x38] sm:$0xf]
        %v1448 = vld [vmem:[%s3 + $0x3c] sm:$0xf]
        %v1449 = vld [vmem:[%s3 + $0x40] sm:$0xf]
        %v1450 = vld [vmem:[%s3 + $0x44] sm:$0xf]
        %v1451 = vld [vmem:[%s3 + $0x48] sm:$0xf]
        %v1452 = vld [vmem:[%s3 + $0x4c] sm:$0xf]
        %v1453 = vld [vmem:[%s3 + $0x50] sm:$0xf]
        %v1454 = vld [vmem:[%s3 + $0x54] sm:$0xf]
        %v1455 = vld [vmem:[%s3 + $0x58] sm:$0xf]
        %v1456 = vld [vmem:[%s3 + $0x5c] sm:$0xf]
        %v1457 = vld [vmem:[%s3 + $0x60] sm:$0xf]
        %v1458 = vld [vmem:[%s3 + $0x64] sm:$0xf]
        %v1459 = vld [vmem:[%s3 + $0x68] sm:$0xf]
        %v1460 = vld [vmem:[%s3 + $0x6c] sm:$0xf]
        %v1461 = vld [vmem:[%s3 + $0x70] sm:$0xf]
        %v1462 = vld [vmem:[%s3 + $0x74] sm:$0xf]
        %v1463 = vld [vmem:[%s3 + $0x78] sm:$0xf]
        %v1464 = vld [vmem:[%s3 + $0x7c] sm:$0xf]
        %v1497 = vunpack.c.l.b16 %v1433
        %v1498 = vunpack.c.l.b16 %v1434
        %v1499 = vunpack.c.l.b16 %v1435
        %v1500 = vunpack.c.l.b16 %v1436
        %v1501 = vunpack.c.l.b16 %v1437
        %v1502 = vunpack.c.l.b16 %v1438
        %v1503 = vunpack.c.l.b16 %v1439
        %v1504 = vunpack.c.l.b16 %v1440
        %v1505 = vunpack.c.l.b16 %v1441
        %v1506 = vunpack.c.l.b16 %v1442
        %v1507 = vunpack.c.l.b16 %v1443
        %v1508 = vunpack.c.l.b16 %v1444
        %v1509 = vunpack.c.l.b16 %v1445
        %v1510 = vunpack.c.l.b16 %v1446
        %v1511 = vunpack.c.l.b16 %v1447
        %v1512 = vunpack.c.l.b16 %v1448
        %v1513 = vunpack.c.l.b16 %v1449
        %v1514 = vunpack.c.l.b16 %v1450
        %v1515 = vunpack.c.l.b16 %v1451
        %v1516 = vunpack.c.l.b16 %v1452
        %v1517 = vunpack.c.l.b16 %v1453
        %v1518 = vunpack.c.l.b16 %v1454
        %v1519 = vunpack.c.l.b16 %v1455
        %v1520 = vunpack.c.l.b16 %v1456
        %v1521 = vunpack.c.l.b16 %v1457
        %v1522 = vunpack.c.l.b16 %v1458
        %v1523 = vunpack.c.l.b16 %v1459
        %v1524 = vunpack.c.l.b16 %v1460
        %v1525 = vunpack.c.l.b16 %v1461
        %v1526 = vunpack.c.l.b16 %v1462
        %v1527 = vunpack.c.l.b16 %v1463
        %v1528 = vunpack.c.l.b16 %v1464
        %v1529 = vpack.c.b16 %v1498, %v1497
        %v1530 = vpack.c.b16 %v1500, %v1499
        %v1531 = vpack.c.b16 %v1502, %v1501
        %v1532 = vpack.c.b16 %v1504, %v1503
        %v1533 = vpack.c.b16 %v1506, %v1505
        %v1534 = vpack.c.b16 %v1508, %v1507
        %v1535 = vpack.c.b16 %v1510, %v1509
        %v1536 = vpack.c.b16 %v1512, %v1511
        %v1537 = vpack.c.b16 %v1514, %v1513
        %v1538 = vpack.c.b16 %v1516, %v1515
        %v1539 = vpack.c.b16 %v1518, %v1517
        %v1540 = vpack.c.b16 %v1520, %v1519
        %v1541 = vpack.c.b16 %v1522, %v1521
        %v1542 = vpack.c.b16 %v1524, %v1523
        %v1543 = vpack.c.b16 %v1526, %v1525
        %v1544 = vpack.c.b16 %v1528, %v1527
        %1561 = vmatpush.bf16.msra.mxu0 %v1536
        %1562 = vmatpush.bf16.msra.mxu0 %v1535
        %1563 = vmatpush.bf16.msra.mxu0 %v1534
        %1564 = vmatpush.bf16.msra.mxu0 %v1533
        %1565 = vmatpush.bf16.msra.mxu0 %v1532
        %1566 = vmatpush.bf16.msra.mxu0 %v1531
        %1567 = vmatpush.bf16.msra.mxu0 %v1530
        %1568 = vmatpush.bf16.msra.mxu0 %v1529
        %1569 = vmatmul.bf16.gmra.mxu0 %v1431
        %v1570 = vpop.f32.mrf.mxu0
        %v1571 = vadd.f32 0.0, %v1570
        %v1572 = vpop.f32.mrf.mxu0
        %v1573 = vadd.f32 0.0, %v1572
        %1574 = vdwg.mxu0
        %1575 = vmatpush.bf16.msra.mxu0 %v1544
        %1576 = vmatpush.bf16.msra.mxu0 %v1543
        %1577 = vmatpush.bf16.msra.mxu0 %v1542
        %1578 = vmatpush.bf16.msra.mxu0 %v1541
        %1579 = vmatpush.bf16.msra.mxu0 %v1540
        %1580 = vmatpush.bf16.msra.mxu0 %v1539
        %1581 = vmatpush.bf16.msra.mxu0 %v1538
        %1582 = vmatpush.bf16.msra.mxu0 %v1537
        %1583 = vmatmul.bf16.gmra.mxu0 %v1432
        %v1584 = vpop.f32.mrf.mxu0
        %v1585 = vadd.f32 %v1571, %v1584
        %v1586 = vpop.f32.mrf.mxu0
        %v1587 = vadd.f32 %v1573, %v1586
        %1588 = vdwg.mxu0
        %v1589 = vmax.f32 %v1585, 1.1920929e-07
        %v1590 = vmax.f32 %v1587, 1.1920929e-07
        %v1591 = vlog2.pop %v1589
        %v1592 = vmul.f32 %v1591, 0.6931472
        %v1593 = vlog2.pop %v1590
        %v1594 = vmul.f32 %v1593, 0.6931472
        %vm1595 = vcmask 654336
        %1596 = vst.msk [vmem:[%s250] sm:$0xff] %vm1595, %v1592
        %1597 = vst.msk [vmem:[%s250 + $0x8] sm:$0xff] %vm1595, %v1594
        %s1598 = sand.u32 %s125, 1
        %s1599 = scalar_lea.sflag [#allocation4], %s1598
        %s1600 = sand.u32 %s125, 1
        %s1601 = smul.addr %s1600, 16
        %s1602 = scalar_lea.vmem [#allocation5], %s1601
        // Predicated region
        $region41: #{tpu_custom_call.1} parent=35 // pred_check
          %p1603 = pneg %p135
        $region42: #{tpu_custom_call.1} parent=35 // pred_check_branch
          %1605 = sbr.rel (%p1603) target = $region44
        $region43: #{tpu_custom_call.1} parent=35 // pred_region
          %s1606 = smul.u32 2, %s19
          %s1607 = ssub.s32 3, %s1606
          %p1608 = scmp.lt.s32.totalorder %s1607, 2
          %s1609 = scalar_select %p1608, %s1607, 2
          %s1610 = smul.u32 8, %s1609
          %s1611 = ssub.s32 16, %s1610
          %s1612 = sshll.u32 %s1611, 4
          %1613 = vsyncadd %s1599, %s1612
          %p1614 = scmp.ne.s32.totalorder 0, %s1610
          %s1615 = smul.addr %s1606, 8
          %s1616 = scalar_lea.hbm %s4, %s1615
          %s1617 = smul.u32 8, %s1609
          %s1618 = sshll.u32 %s1602, 4
          %s1619 = int_to_ptr.vmem [resolvable:$true] %s1618
          %s1620 = sshll.u32 %s1616, 4
          %s1621 = int_to_ptr.hbm [resolvable:$true] %s1620
          %s1622 = sshll.u32 %s1617, 4
          %1626 = dma.vmem_to_hbm [thread:$0]  (%p1614), %s1619, %s1622, %s1621, %s1599, 128, 128, 8
        $region44: #{tpu_custom_call.1} parent=35 // pred_fallthru
          _
      $region36: #{tpu_custom_call.1} parent=5 // pred_fallthru
        _
      %p1627 = scmp.le.s32.totalorder 2, %s14
      // Predicated region
      $region45: #{tpu_custom_call.1} parent=5 // pred_check
        %p1628 = pneg %p1627
      $region46: #{tpu_custom_call.1} parent=5 // pred_check_branch
        %1630 = sbr.rel (%p1628) target = $region48
      $region47: #{tpu_custom_call.1} parent=5 // pred_region
        %s1631 = ssub.s32 %s14, 2
        // Predicated region
        $region49: #{tpu_custom_call.1} parent=47 // pred_check
          %p1632 = pneg %p141
        $region50: #{tpu_custom_call.1} parent=47 // pred_check_branch
          %1634 = sbr.rel (%p1632) target = $region52
        $region51: #{tpu_custom_call.1} parent=47 // pred_region
          %s1635 = sand.u32 %s126, 1
          %s1636 = scalar_lea.sflag [#allocation4], %s1635
          %s1637 = sand.u32 %s126, 1
          %s1638 = smul.addr %s1637, 16
          %s1639 = scalar_lea.vmem [#allocation5], %s1638
          %1641 = dma.done %s1636, 256
        $region52: #{tpu_custom_call.1} parent=47 // pred_fallthru
          _
      $region48: #{tpu_custom_call.1} parent=5 // pred_fallthru
        _
    $region6: #{tpu_custom_call.1} parent=1 // loop_footer
      %s18 = sadd.s32 1, %s14
    $region7: #{tpu_custom_call.1} parent=1 // loop_footer_branch
      %13 = sbr.rel target = $region3
    $region8: #{tpu_custom_call.1} parent=1 // loop_exit
      _
    %1642 = vsyncpa [#allocation3], 1
    %s1643 = scalar_lea.sflag [#allocation3], 1
    %1644 = vsyncpa %s1643, 1
    %1645 = vsyncpa [#allocation4], 1
    %s1646 = scalar_lea.sflag [#allocation4], 1
    %1647 = vsyncpa %s1646, 1

</llo_original>
